<compile_context>
chip_gen: v7x
topology: tpu7x:2x2x1
jax: 0.10.0
libtpu: 0.0.40
codegen_flags: <defaults>
</compile_context>

<pallas_src>
import jax
import jax.numpy as jnp
from jax.experimental import pallas as pl
from jax.experimental.pallas import tpu as pltpu

EPS = 1e-5  # PyTorch BatchNorm2d default


def double_conv_kernel(x_ref, t1_ref, g1_ref, be1_ref, t2_ref, g2_ref, be2_ref,
                       avg_ref, out_ref, xpad_ref, hpad_ref):
    # x_ref   : (N, H, W*Cin)           bf16  unpadded input (NHWC order, W/C merged)
    # t1_ref  : (3, (W+2)*Cin,  W*Cout) bf16  block-Toeplitz conv1 weights
    # t2_ref  : (3, (W+2)*Cout, W*Cout) bf16  block-Toeplitz conv2 weights
    # g*/be*  : (1, W*Cout)             f32   BN gamma/beta pre-tiled per output column
    # avg_ref : (W*Cout, W*Cout)        f32   per-channel fold+average+broadcast matrix
    # out_ref : (N*H, W*Cout)           f32   lane-dense output
    # xpad_ref: (N, H+2, (W+2)*Cin)     bf16  zero-halo conv1 input scratch
    # hpad_ref: (N, H+2, (W+2)*Cout)    bf16  zero-halo conv2 input scratch
    N, H, WCin = x_ref.shape
    NH, WCout = out_ref.shape
    Kin = xpad_ref.shape[-1]            # (W+2)*Cin
    Kout = hpad_ref.shape[-1]           # (W+2)*Cout
    Cin = (Kin - WCin) // 2
    Cout = (Kout - WCout) // 2

    def conv3x3(pad_ref, t_ref, k):
        # One MXU matmul per kernel row; width-axis taps live inside T_dy.
        acc = jnp.zeros((NH, WCout), jnp.float32)
        for dy in range(3):
            slab = pad_ref[:, dy:dy + H, :].reshape(NH, k)       # bf16, leading-dim collapse
            acc = acc + jnp.dot(slab, t_ref[dy],
                                preferred_element_type=jnp.float32)
        return acc

    def bn_relu(acc, g_cols, be_cols):
        # Two-pass per-channel batch statistics; avg_ref folds the W column groups per
        # channel, divides by N*H*W and broadcasts back to (1, W*Cout) in one matmul.
        mean = jnp.dot(jnp.sum(acc, axis=0, keepdims=True), avg_ref[...],
                       preferred_element_type=jnp.float32)
        centered = acc - mean
        var = jnp.dot(jnp.sum(centered * centered, axis=0, keepdims=True),
                      avg_ref[...], preferred_element_type=jnp.float32)
        scale = g_cols * jax.lax.rsqrt(var + EPS)
        shift = be_cols - mean * scale
        return jnp.maximum(acc * scale + shift, 0.0)             # single FMA+max sweep

    # ---------------- conv1 -> BN1 -> ReLU ----------------
    xpad_ref[...] = jnp.zeros(xpad_ref.shape, xpad_ref.dtype)    # single zero sweep
    xpad_ref[:, 1:H + 1, Cin:Cin + WCin] = x_ref[...]
    h = bn_relu(conv3x3(xpad_ref, t1_ref, Kin), g1_ref[...], be1_ref[...])

    # ---------------- conv2 -> BN2 -> ReLU ----------------
    hpad_ref[...] = jnp.zeros(hpad_ref.shape, hpad_ref.dtype)
    hpad_ref[:, 1:H + 1, Cout:Cout + WCout] = (
        h.reshape(N, H, WCout).astype(jnp.bfloat16))             # cast once for the MXU
    out_ref[...] = bn_relu(conv3x3(hpad_ref, t2_ref, Kout), g2_ref[...], be2_ref[...])


def build_toeplitz(w_hwio, W):
    """(3,3,Cin,Cout) HWIO conv weights -> (3, (W+2)*Cin, W*Cout) block-Toeplitz
    factors: T_dy[(w+dx)*Cin + c, w*Cout + o] = w_hwio[dy, dx, c, o]."""
    mats = []
    for dy in range(3):
        t = 0.0
        for dx in range(3):
            shift = jnp.eye(W + 2, W, k=-dx, dtype=jnp.float32)   # ones at [w+dx, w]
            t = t + jnp.kron(shift, w_hwio[dy, dx].astype(jnp.float32))
        mats.append(t)
    return jnp.stack(mats).astype(jnp.bfloat16)


def double_conv(x_nchw, params):
    """Wrapper: NCHW in -> NCHW out (matches the PyTorch module)."""
    N, Cin, H, W = x_nchw.shape
    Cout = params["g1"].shape[-1]

    x = jnp.transpose(x_nchw, (0, 2, 3, 1))                       # NHWC
    x = x.astype(jnp.bfloat16).reshape(N, H, W * Cin)             # cast once; free reshape

    t1 = build_toeplitz(params["w1"], W)                          # (3,(W+2)Cin, W*Cout)
    t2 = build_toeplitz(params["w2"], W)                          # (3,(W+2)Cout,W*Cout)

    # avg[i, j] = 1/(N*H*W) iff columns i and j belong to the same channel.
    avg = jnp.kron(jnp.ones((W, W), jnp.float32),
                   jnp.eye(Cout, dtype=jnp.float32)) / float(N * H * W)

    def cols(v):  # (Cout,) -> (1, W*Cout) matching column layout w*Cout + c
        return jnp.tile(v.astype(jnp.float32), W).reshape(1, W * Cout)

    out2d = pl.pallas_call(
        double_conv_kernel,
        out_shape=jax.ShapeDtypeStruct((N * H, W * Cout), jnp.float32),
        in_specs=[pl.BlockSpec(memory_space=pltpu.MemorySpace.VMEM)] * 8,
        out_specs=pl.BlockSpec(memory_space=pltpu.MemorySpace.VMEM),
        scratch_shapes=[
            pltpu.VMEM((N, H + 2, (W + 2) * Cin), jnp.bfloat16),
            pltpu.VMEM((N, H + 2, (W + 2) * Cout), jnp.bfloat16),
        ],
        compiler_params=pltpu.CompilerParams(vmem_limit_bytes=32 * 1024 * 1024),
    )(x, t1, cols(params["g1"]), cols(params["be1"]),
      t2, cols(params["g2"]), cols(params["be2"]), avg)

    out = out2d.reshape(N, H, W, Cout)
    return jnp.transpose(out, (0, 3, 1, 2))                       # back to NCHW


def init_params(key, in_ch, out_ch):
    """Deterministic synthetic parameters (HWIO conv weights, BN affine)."""
    k1, k2, k3, k4, k5, k6, k7, k8 = jax.random.split(key, 8)
    s1 = 1.0 / jnp.sqrt(in_ch * 9.0)
    s2 = 1.0 / jnp.sqrt(out_ch * 9.0)
    return {
        "w1": jax.random.normal(k1, (3, 3, in_ch, out_ch), jnp.float32) * s1,
        "b1": jax.random.normal(k2, (out_ch,), jnp.float32) * s1,   # reference only
        "g1": 0.5 + jax.random.uniform(k3, (out_ch,), jnp.float32),
        "be1": jax.random.normal(k4, (out_ch,), jnp.float32) * 0.1,
        "w2": jax.random.normal(k5, (3, 3, out_ch, out_ch), jnp.float32) * s2,
        "b2": jax.random.normal(k6, (out_ch,), jnp.float32) * s2,   # reference only
        "g2": 0.5 + jax.random.uniform(k7, (out_ch,), jnp.float32),
        "be2": jax.random.normal(k8, (out_ch,), jnp.float32) * 0.1,
    }


def double_conv_ref(x_nchw, p):
    """Pure-JAX reference.  Keeps the conv bias and uses lax.conv + classic two-pass
    BN, with conv operands rounded to bf16 (matching the MXU operands) and f32 math
    elsewhere — validating both the bias cancellation and the Toeplitz reformulation."""
    x = jnp.transpose(x_nchw, (0, 2, 3, 1)).astype(jnp.float32)

    def conv(xx, w, b):
        xq = xx.astype(jnp.bfloat16).astype(jnp.float32)
        wq = w.astype(jnp.bfloat16).astype(jnp.float32)
        y = jax.lax.conv_general_dilated(
            xq, wq, (1, 1), "SAME",
            dimension_numbers=("NHWC", "HWIO", "NHWC"))
        return y + b.reshape(1, 1, 1, -1)

    def bn_relu(y, g, be):
        m = jnp.mean(y, axis=(0, 1, 2), keepdims=True)
        v = jnp.mean((y - m) ** 2, axis=(0, 1, 2), keepdims=True)
        y = (y - m) * jax.lax.rsqrt(v + EPS) * g.reshape(1, 1, 1, -1) \
            + be.reshape(1, 1, 1, -1)
        return jnp.maximum(y, 0.0)

    y = bn_relu(conv(x, p["w1"], p["b1"]), p["g1"], p["be1"])
    y = bn_relu(conv(y, p["w2"], p["b2"]), p["g2"], p["be2"])
    return jnp.transpose(y, (0, 3, 1, 2))


if __name__ == "__main__":
    key = jax.random.PRNGKey(0)
    kx, kp = jax.random.split(key)

    N, IN_CH, OUT_CH, H, W = 2, 4, 8, 16, 16
    x = jax.random.normal(kx, (N, IN_CH, H, W), jnp.float32)
    params = init_params(kp, IN_CH, OUT_CH)

    out = jax.block_until_ready(double_conv(x, params))
    ref = jax.block_until_ready(double_conv_ref(x, params))

    assert out.shape == (N, OUT_CH, H, W)
    max_err = float(jnp.max(jnp.abs(out - ref)))
    # bf16 MXU operands + bias-cancellation rounding -> small, non-zero deviation
    # from the biased f32 lax.conv reference.
    assert jnp.allclose(out, ref, atol=5e-3, rtol=5e-3), max_err

    print("KERNEL_OK")
</pallas_src>

<mosaic_0001>
module attributes {stable_mosaic.version = 11 : i64} {
  func.func @double_conv_kernel(%arg0: memref<2x16x64xbf16, #tpu.memory_space<vmem>>, %arg1: memref<3x72x128xbf16, #tpu.memory_space<vmem>>, %arg2: memref<1x128xf32, #tpu.memory_space<vmem>>, %arg3: memref<1x128xf32, #tpu.memory_space<vmem>>, %arg4: memref<3x144x128xbf16, #tpu.memory_space<vmem>>, %arg5: memref<1x128xf32, #tpu.memory_space<vmem>>, %arg6: memref<1x128xf32, #tpu.memory_space<vmem>>, %arg7: memref<128x128xf32, #tpu.memory_space<vmem>>, %arg8: memref<32x128xf32, #tpu.memory_space<vmem>>, %arg9: memref<2x18x72xbf16, #tpu.memory_space<vmem>>, %arg10: memref<2x18x144xbf16, #tpu.memory_space<vmem>>) attributes {dimension_semantics = [], scalar_prefetch = 0 : i64, scratch_operands = 2 : i64, tpu.core_type = #tpu.core_type<tc>} {
    %cst = arith.constant 0.000000e+00 : bf16
    %0 = vector.broadcast %cst : bf16 to vector<2x18x72xbf16>
    %c0 = arith.constant 0 : index
    %c0_0 = arith.constant 0 : index
    %c0_1 = arith.constant 0 : index
    %1 = vector.load %arg9[%c0, %c0_0, %c0_1] : memref<2x18x72xbf16, #tpu.memory_space<vmem>>, vector<2x18x72xbf16>
    tpu.vector_store %arg9[%c0, %c0_0, %c0_1], %0 {strides = array<i32>} : memref<2x18x72xbf16, #tpu.memory_space<vmem>>, vector<2x18x72xbf16>,
    %c0_2 = arith.constant 0 : index
    %c0_3 = arith.constant 0 : index
    %c0_4 = arith.constant 0 : index
    %2 = vector.load %arg0[%c0_2, %c0_3, %c0_4] : memref<2x16x64xbf16, #tpu.memory_space<vmem>>, vector<2x16x64xbf16>
    %c0_5 = arith.constant 0 : index
    %c1 = arith.constant 1 : index
    %c4 = arith.constant 4 : index
    %3 = vector.load %arg9[%c0_5, %c1, %c4] : memref<2x18x72xbf16, #tpu.memory_space<vmem>>, vector<2x16x64xbf16>
    tpu.vector_store %arg9[%c0_5, %c1, %c4], %2 {strides = array<i32>} : memref<2x18x72xbf16, #tpu.memory_space<vmem>>, vector<2x16x64xbf16>,
    %cst_6 = arith.constant 0.000000e+00 : f32
    %4 = vector.broadcast %cst_6 : f32 to vector<32x128xf32>
    %c0_7 = arith.constant 0 : index
    %c0_8 = arith.constant 0 : index
    %c0_9 = arith.constant 0 : index
    %5 = vector.load %arg9[%c0_7, %c0_8, %c0_9] : memref<2x18x72xbf16, #tpu.memory_space<vmem>>, vector<2x16x72xbf16>
    %6 = vector.shape_cast %5 : vector<2x16x72xbf16> to vector<32x72xbf16>
    %c0_10 = arith.constant 0 : index
    %c0_11 = arith.constant 0 : index
    %c0_12 = arith.constant 0 : index
    %7 = vector.load %arg1[%c0_10, %c0_11, %c0_12] : memref<3x72x128xbf16, #tpu.memory_space<vmem>>, vector<1x72x128xbf16>
    %8 = vector.shape_cast %7 : vector<1x72x128xbf16> to vector<72x128xbf16>
    %cst_13 = arith.constant dense<0.000000e+00> : vector<32x128xf32>
    %9 = tpu.matmul %6, %8, %cst_13 {dimension_numbers = #tpu.dot_dimension_numbers<[1], [0], [0], [1], [0, 0, 1, 1], [], []>} : vector<32x72xbf16>, vector<72x128xbf16>, vector<32x128xf32> -> vector<32x128xf32>
    %10 = arith.addf %4, %9 : vector<32x128xf32>
    %c0_14 = arith.constant 0 : index
    %c1_15 = arith.constant 1 : index
    %c0_16 = arith.constant 0 : index
    %11 = vector.load %arg9[%c0_14, %c1_15, %c0_16] : memref<2x18x72xbf16, #tpu.memory_space<vmem>>, vector<2x16x72xbf16>
    %12 = vector.shape_cast %11 : vector<2x16x72xbf16> to vector<32x72xbf16>
    %c1_17 = arith.constant 1 : index
    %c0_18 = arith.constant 0 : index
    %c0_19 = arith.constant 0 : index
    %13 = vector.load %arg1[%c1_17, %c0_18, %c0_19] : memref<3x72x128xbf16, #tpu.memory_space<vmem>>, vector<1x72x128xbf16>
    %14 = vector.shape_cast %13 : vector<1x72x128xbf16> to vector<72x128xbf16>
    %cst_20 = arith.constant dense<0.000000e+00> : vector<32x128xf32>
    %15 = tpu.matmul %12, %14, %cst_20 {dimension_numbers = #tpu.dot_dimension_numbers<[1], [0], [0], [1], [0, 0, 1, 1], [], []>} : vector<32x72xbf16>, vector<72x128xbf16>, vector<32x128xf32> -> vector<32x128xf32>
    %16 = arith.addf %10, %15 : vector<32x128xf32>
    %c0_21 = arith.constant 0 : index
    %c2 = arith.constant 2 : index
    %c0_22 = arith.constant 0 : index
    %17 = vector.load %arg9[%c0_21, %c2, %c0_22] : memref<2x18x72xbf16, #tpu.memory_space<vmem>>, vector<2x16x72xbf16>
    %18 = vector.shape_cast %17 : vector<2x16x72xbf16> to vector<32x72xbf16>
    %c2_23 = arith.constant 2 : index
    %c0_24 = arith.constant 0 : index
    %c0_25 = arith.constant 0 : index
    %19 = vector.load %arg1[%c2_23, %c0_24, %c0_25] : memref<3x72x128xbf16, #tpu.memory_space<vmem>>, vector<1x72x128xbf16>
    %20 = vector.shape_cast %19 : vector<1x72x128xbf16> to vector<72x128xbf16>
    %cst_26 = arith.constant dense<0.000000e+00> : vector<32x128xf32>
    %21 = tpu.matmul %18, %20, %cst_26 {dimension_numbers = #tpu.dot_dimension_numbers<[1], [0], [0], [1], [0, 0, 1, 1], [], []>} : vector<32x72xbf16>, vector<72x128xbf16>, vector<32x128xf32> -> vector<32x128xf32>
    %22 = arith.addf %16, %21 : vector<32x128xf32>
    %c0_27 = arith.constant 0 : index
    %c0_28 = arith.constant 0 : index
    %23 = vector.load %arg2[%c0_27, %c0_28] : memref<1x128xf32, #tpu.memory_space<vmem>>, vector<1x128xf32>
    %c0_29 = arith.constant 0 : index
    %c0_30 = arith.constant 0 : index
    %24 = vector.load %arg3[%c0_29, %c0_30] : memref<1x128xf32, #tpu.memory_space<vmem>>, vector<1x128xf32>
    %cst_31 = arith.constant dense<0.000000e+00> : vector<128xf32>
    %25 = vector.multi_reduction <add>, %22, %cst_31 [0] : vector<32x128xf32> to vector<128xf32>
    %26 = vector.shape_cast %25 : vector<128xf32> to vector<1x128xf32>
    %c0_32 = arith.constant 0 : index
    %c0_33 = arith.constant 0 : index
    %27 = vector.load %arg7[%c0_32, %c0_33] : memref<128x128xf32, #tpu.memory_space<vmem>>, vector<128x128xf32>
    %cst_34 = arith.constant dense<0.000000e+00> : vector<1x128xf32>
    %28 = tpu.matmul %26, %27, %cst_34 {dimension_numbers = #tpu.dot_dimension_numbers<[1], [0], [0], [1], [0, 0, 1, 1], [], []>} : vector<1x128xf32>, vector<128x128xf32>, vector<1x128xf32> -> vector<1x128xf32>
    %29 = vector.broadcast %28 : vector<1x128xf32> to vector<32x128xf32>
    %30 = arith.subf %22, %29 : vector<32x128xf32>
    %31 = arith.mulf %30, %30 : vector<32x128xf32>
    %cst_35 = arith.constant dense<0.000000e+00> : vector<128xf32>
    %32 = vector.multi_reduction <add>, %31, %cst_35 [0] : vector<32x128xf32> to vector<128xf32>
    %33 = vector.shape_cast %32 : vector<128xf32> to vector<1x128xf32>
    %c0_36 = arith.constant 0 : index
    %c0_37 = arith.constant 0 : index
    %34 = vector.load %arg7[%c0_36, %c0_37] : memref<128x128xf32, #tpu.memory_space<vmem>>, vector<128x128xf32>
    %cst_38 = arith.constant dense<0.000000e+00> : vector<1x128xf32>
    %35 = tpu.matmul %33, %34, %cst_38 {dimension_numbers = #tpu.dot_dimension_numbers<[1], [0], [0], [1], [0, 0, 1, 1], [], []>} : vector<1x128xf32>, vector<128x128xf32>, vector<1x128xf32> -> vector<1x128xf32>
    %cst_39 = arith.constant 9.99999974E-6 : f32
    %36 = vector.broadcast %cst_39 : f32 to vector<1x128xf32>
    %37 = arith.addf %35, %36 : vector<1x128xf32>
    %38 = math.rsqrt %37 : vector<1x128xf32>
    %39 = arith.mulf %23, %38 : vector<1x128xf32>
    %40 = arith.mulf %28, %39 : vector<1x128xf32>
    %41 = arith.subf %24, %40 : vector<1x128xf32>
    %42 = vector.broadcast %39 : vector<1x128xf32> to vector<32x128xf32>
    %43 = arith.mulf %22, %42 : vector<32x128xf32>
    %44 = vector.broadcast %41 : vector<1x128xf32> to vector<32x128xf32>
    %45 = arith.addf %43, %44 : vector<32x128xf32>
    %cst_40 = arith.constant 0.000000e+00 : f32
    %46 = vector.broadcast %cst_40 : f32 to vector<32x128xf32>
    %47 = arith.maximumf %45, %46 : vector<32x128xf32>
    %cst_41 = arith.constant 0.000000e+00 : bf16
    %48 = vector.broadcast %cst_41 : bf16 to vector<2x18x144xbf16>
    %c0_42 = arith.constant 0 : index
    %c0_43 = arith.constant 0 : index
    %c0_44 = arith.constant 0 : index
    %49 = vector.load %arg10[%c0_42, %c0_43, %c0_44] : memref<2x18x144xbf16, #tpu.memory_space<vmem>>, vector<2x18x144xbf16>
    tpu.vector_store %arg10[%c0_42, %c0_43, %c0_44], %48 {strides = array<i32>} : memref<2x18x144xbf16, #tpu.memory_space<vmem>>, vector<2x18x144xbf16>,
    %50 = vector.shape_cast %47 : vector<32x128xf32> to vector<2x16x128xf32>
    %51 = arith.truncf %50 : vector<2x16x128xf32> to vector<2x16x128xbf16>
    %c0_45 = arith.constant 0 : index
    %c1_46 = arith.constant 1 : index
    %c8 = arith.constant 8 : index
    %52 = vector.load %arg10[%c0_45, %c1_46, %c8] : memref<2x18x144xbf16, #tpu.memory_space<vmem>>, vector<2x16x128xbf16>
    tpu.vector_store %arg10[%c0_45, %c1_46, %c8], %51 {strides = array<i32>} : memref<2x18x144xbf16, #tpu.memory_space<vmem>>, vector<2x16x128xbf16>,
    %cst_47 = arith.constant 0.000000e+00 : f32
    %53 = vector.broadcast %cst_47 : f32 to vector<32x128xf32>
    %c0_48 = arith.constant 0 : index
    %c0_49 = arith.constant 0 : index
    %c0_50 = arith.constant 0 : index
    %54 = vector.load %arg10[%c0_48, %c0_49, %c0_50] : memref<2x18x144xbf16, #tpu.memory_space<vmem>>, vector<2x16x144xbf16>
    %55 = vector.shape_cast %54 : vector<2x16x144xbf16> to vector<32x144xbf16>
    %c0_51 = arith.constant 0 : index
    %c0_52 = arith.constant 0 : index
    %c0_53 = arith.constant 0 : index
    %56 = vector.load %arg4[%c0_51, %c0_52, %c0_53] : memref<3x144x128xbf16, #tpu.memory_space<vmem>>, vector<1x144x128xbf16>
    %57 = vector.shape_cast %56 : vector<1x144x128xbf16> to vector<144x128xbf16>
    %cst_54 = arith.constant dense<0.000000e+00> : vector<32x128xf32>
    %58 = tpu.matmul %55, %57, %cst_54 {dimension_numbers = #tpu.dot_dimension_numbers<[1], [0], [0], [1], [0, 0, 1, 1], [], []>} : vector<32x144xbf16>, vector<144x128xbf16>, vector<32x128xf32> -> vector<32x128xf32>
    %59 = arith.addf %53, %58 : vector<32x128xf32>
    %c0_55 = arith.constant 0 : index
    %c1_56 = arith.constant 1 : index
    %c0_57 = arith.constant 0 : index
    %60 = vector.load %arg10[%c0_55, %c1_56, %c0_57] : memref<2x18x144xbf16, #tpu.memory_space<vmem>>, vector<2x16x144xbf16>
    %61 = vector.shape_cast %60 : vector<2x16x144xbf16> to vector<32x144xbf16>
    %c1_58 = arith.constant 1 : index
    %c0_59 = arith.constant 0 : index
    %c0_60 = arith.constant 0 : index
    %62 = vector.load %arg4[%c1_58, %c0_59, %c0_60] : memref<3x144x128xbf16, #tpu.memory_space<vmem>>, vector<1x144x128xbf16>
    %63 = vector.shape_cast %62 : vector<1x144x128xbf16> to vector<144x128xbf16>
    %cst_61 = arith.constant dense<0.000000e+00> : vector<32x128xf32>
    %64 = tpu.matmul %61, %63, %cst_61 {dimension_numbers = #tpu.dot_dimension_numbers<[1], [0], [0], [1], [0, 0, 1, 1], [], []>} : vector<32x144xbf16>, vector<144x128xbf16>, vector<32x128xf32> -> vector<32x128xf32>
    %65 = arith.addf %59, %64 : vector<32x128xf32>
    %c0_62 = arith.constant 0 : index
    %c2_63 = arith.constant 2 : index
    %c0_64 = arith.constant 0 : index
    %66 = vector.load %arg10[%c0_62, %c2_63, %c0_64] : memref<2x18x144xbf16, #tpu.memory_space<vmem>>, vector<2x16x144xbf16>
    %67 = vector.shape_cast %66 : vector<2x16x144xbf16> to vector<32x144xbf16>
    %c2_65 = arith.constant 2 : index
    %c0_66 = arith.constant 0 : index
    %c0_67 = arith.constant 0 : index
    %68 = vector.load %arg4[%c2_65, %c0_66, %c0_67] : memref<3x144x128xbf16, #tpu.memory_space<vmem>>, vector<1x144x128xbf16>
    %69 = vector.shape_cast %68 : vector<1x144x128xbf16> to vector<144x128xbf16>
    %cst_68 = arith.constant dense<0.000000e+00> : vector<32x128xf32>
    %70 = tpu.matmul %67, %69, %cst_68 {dimension_numbers = #tpu.dot_dimension_numbers<[1], [0], [0], [1], [0, 0, 1, 1], [], []>} : vector<32x144xbf16>, vector<144x128xbf16>, vector<32x128xf32> -> vector<32x128xf32>
    %71 = arith.addf %65, %70 : vector<32x128xf32>
    %c0_69 = arith.constant 0 : index
    %c0_70 = arith.constant 0 : index
    %72 = vector.load %arg5[%c0_69, %c0_70] : memref<1x128xf32, #tpu.memory_space<vmem>>, vector<1x128xf32>
    %c0_71 = arith.constant 0 : index
    %c0_72 = arith.constant 0 : index
    %73 = vector.load %arg6[%c0_71, %c0_72] : memref<1x128xf32, #tpu.memory_space<vmem>>, vector<1x128xf32>
    %cst_73 = arith.constant dense<0.000000e+00> : vector<128xf32>
    %74 = vector.multi_reduction <add>, %71, %cst_73 [0] : vector<32x128xf32> to vector<128xf32>
    %75 = vector.shape_cast %74 : vector<128xf32> to vector<1x128xf32>
    %c0_74 = arith.constant 0 : index
    %c0_75 = arith.constant 0 : index
    %76 = vector.load %arg7[%c0_74, %c0_75] : memref<128x128xf32, #tpu.memory_space<vmem>>, vector<128x128xf32>
    %cst_76 = arith.constant dense<0.000000e+00> : vector<1x128xf32>
    %77 = tpu.matmul %75, %76, %cst_76 {dimension_numbers = #tpu.dot_dimension_numbers<[1], [0], [0], [1], [0, 0, 1, 1], [], []>} : vector<1x128xf32>, vector<128x128xf32>, vector<1x128xf32> -> vector<1x128xf32>
    %78 = vector.broadcast %77 : vector<1x128xf32> to vector<32x128xf32>
    %79 = arith.subf %71, %78 : vector<32x128xf32>
    %80 = arith.mulf %79, %79 : vector<32x128xf32>
    %cst_77 = arith.constant dense<0.000000e+00> : vector<128xf32>
    %81 = vector.multi_reduction <add>, %80, %cst_77 [0] : vector<32x128xf32> to vector<128xf32>
    %82 = vector.shape_cast %81 : vector<128xf32> to vector<1x128xf32>
    %c0_78 = arith.constant 0 : index
    %c0_79 = arith.constant 0 : index
    %83 = vector.load %arg7[%c0_78, %c0_79] : memref<128x128xf32, #tpu.memory_space<vmem>>, vector<128x128xf32>
    %cst_80 = arith.constant dense<0.000000e+00> : vector<1x128xf32>
    %84 = tpu.matmul %82, %83, %cst_80 {dimension_numbers = #tpu.dot_dimension_numbers<[1], [0], [0], [1], [0, 0, 1, 1], [], []>} : vector<1x128xf32>, vector<128x128xf32>, vector<1x128xf32> -> vector<1x128xf32>
    %cst_81 = arith.constant 9.99999974E-6 : f32
    %85 = vector.broadcast %cst_81 : f32 to vector<1x128xf32>
    %86 = arith.addf %84, %85 : vector<1x128xf32>
    %87 = math.rsqrt %86 : vector<1x128xf32>
    %88 = arith.mulf %72, %87 : vector<1x128xf32>
    %89 = arith.mulf %77, %88 : vector<1x128xf32>
    %90 = arith.subf %73, %89 : vector<1x128xf32>
    %91 = vector.broadcast %88 : vector<1x128xf32> to vector<32x128xf32>
    %92 = arith.mulf %71, %91 : vector<32x128xf32>
    %93 = vector.broadcast %90 : vector<1x128xf32> to vector<32x128xf32>
    %94 = arith.addf %92, %93 : vector<32x128xf32>
    %cst_82 = arith.constant 0.000000e+00 : f32
    %95 = vector.broadcast %cst_82 : f32 to vector<32x128xf32>
    %96 = arith.maximumf %94, %95 : vector<32x128xf32>
    %c0_83 = arith.constant 0 : index
    %c0_84 = arith.constant 0 : index
    %97 = vector.load %arg8[%c0_83, %c0_84] : memref<32x128xf32, #tpu.memory_space<vmem>>, vector<32x128xf32>
    tpu.vector_store %arg8[%c0_83, %c0_84], %96 {strides = array<i32>} : memref<32x128xf32, #tpu.memory_space<vmem>>, vector<32x128xf32>,
    return
  }
}

</mosaic_0001>

<llo_original>
// kernel: tpu_custom_call.1
$region0: #{tpu_custom_call.1}
  #allocation0 [shape = 'u32[]', space=smem, size = 0x4, offset = 0x4, fixed_abs, tag = 'smem constant byte address 0x4 - core index']
  #allocation1 [shape = 'u32[144,128]{1,0:T(1,128)}', space=vmem, size = 0x12000, scoped, tag = 'internal scratch']
  #allocation2 [shape = 'bf16[2,18,72]{2,1,0:T(8,128)(2,1)}', space=vmem, size = 0x3000, scoped, tag = 'scratch operand']
  #allocation3 [shape = 'bf16[2,18,144]{2,1,0:T(8,128)(2,1)}', space=vmem, size = 0x6000, scoped, tag = 'scratch operand']
  %s0 = inlined_call_operand.hbm [shape: bf16[2,16,64], index: 0, kind: input, shape index: {}]
  %s1 = inlined_call_operand.hbm [shape: bf16[3,72,128], index: 1, kind: input, shape index: {}]
  %s2 = inlined_call_operand.vmem [shape: f32[1,128], index: 2, kind: input, shape index: {}]
  %s3 = inlined_call_operand.vmem [shape: f32[1,128], index: 3, kind: input, shape index: {}]
  %s4 = inlined_call_operand.hbm [shape: bf16[3,144,128], index: 4, kind: input, shape index: {}]
  %s5 = inlined_call_operand.vmem [shape: f32[1,128], index: 5, kind: input, shape index: {}]
  %s6 = inlined_call_operand.vmem [shape: f32[1,128], index: 6, kind: input, shape index: {}]
  %s7 = inlined_call_operand.hbm [shape: f32[128,128], index: 7, kind: input, shape index: {}]
  %s8 = inlined_call_operand.hbm [shape: f32[32,128], index: 8, kind: output, shape index: {}]
  %s9 = sld [smem:[#allocation0]]
  $region58: #{tpu_custom_call.1} parent=0
    _
  %s11 = ssub.s32 1, %s9
  %s12 = scalar_select 0, %s11, %s9
  $region1: #{tpu_custom_call.1} parent=0
    #allocation4 [shape = 'u8[8192]{0}', space=vmem, size = 0x2000, scoped, tag = 'input window, operand 0, single buffered']
    #allocation5 [shape = 's32[1]{0}', space=sflag, size = 0x4, scoped, tag = 'scoped memory for tpu_custom_call.1']
    #allocation6 [shape = 's32[1]{0}', space=sflag, size = 0x4, scoped, tag = 'scoped memory for tpu_custom_call.1']
    #allocation7 [shape = 'u8[55296]{0}', space=vmem, size = 0xd800, scoped, tag = 'input window, operand 1, single buffered']
    #allocation8 [shape = 's32[1]{0}', space=sflag, size = 0x4, scoped, tag = 'scoped memory for tpu_custom_call.1']
    #allocation9 [shape = 'u8[110592]{0}', space=vmem, size = 0x1b000, scoped, tag = 'input window, operand 4, single buffered']
    #allocation10 [shape = 'u8[65536]{0}', space=vmem, size = 0x10000, scoped, tag = 'input window, operand 7, single buffered']
    #allocation11 [shape = 's32[1]{0}', space=sflag, size = 0x4, scoped, tag = 'scoped memory for tpu_custom_call.1']
    #allocation12 [shape = 'u8[16384]{0}', space=vmem, size = 0x4000, scoped, tag = 'output window, operand 0, single buffered']
    %13 = vsyncpa [#allocation5], 0
    %14 = vsyncpa [#allocation8], 0
    %15 = vsyncpa [#allocation11], 0
    %16 = vsyncpa [#allocation6], 0
    // Predicated region
    $region2: #{tpu_custom_call.1} parent=1 // pred_check
      _
    $region3: #{tpu_custom_call.1} parent=1 // pred_check_branch
      %18 = sbr.rel (0) target = $region5
    $region4: #{tpu_custom_call.1} parent=1 // pred_region
      %s20 = ssub.s32 256, 256
      %21 = vsyncadd [#allocation5], %s20
      %s22 = sshll.u32 [#allocation4], 4
      %s23 = int_to_ptr.vmem [resolvable:$true] %s22
      %28 = dma.hbm_to_vmem [thread:$0]  %s0, 256, %s23, [#allocation5], 64, 64, 4
    $region5: #{tpu_custom_call.1} parent=1 // pred_fallthru
      _
    // Predicated region
    $region6: #{tpu_custom_call.1} parent=1 // pred_check
      _
    $region7: #{tpu_custom_call.1} parent=1 // pred_check_branch
      %30 = sbr.rel (0) target = $region9
    $region8: #{tpu_custom_call.1} parent=1 // pred_region
      %s32 = ssub.s32 1728, 1728
      %33 = vsyncadd [#allocation8], %s32
      %s34 = sshll.u32 [#allocation7], 4
      %s35 = int_to_ptr.vmem [resolvable:$true] %s34
      %40 = dma.hbm_to_vmem [thread:$0]  %s1, 1728, %s35, [#allocation8], 64, 64, 4
    $region9: #{tpu_custom_call.1} parent=1 // pred_fallthru
      _
    // Predicated region
    $region10: #{tpu_custom_call.1} parent=1 // pred_check
      _
    $region11: #{tpu_custom_call.1} parent=1 // pred_check_branch
      %42 = sbr.rel (0) target = $region13
    $region12: #{tpu_custom_call.1} parent=1 // pred_region
      _
    $region13: #{tpu_custom_call.1} parent=1 // pred_fallthru
      _
    // Predicated region
    $region14: #{tpu_custom_call.1} parent=1 // pred_check
      _
    $region15: #{tpu_custom_call.1} parent=1 // pred_check_branch
      %44 = sbr.rel (0) target = $region17
    $region16: #{tpu_custom_call.1} parent=1 // pred_region
      _
    $region17: #{tpu_custom_call.1} parent=1 // pred_fallthru
      _
    // Predicated region
    $region18: #{tpu_custom_call.1} parent=1 // pred_check
      _
    $region19: #{tpu_custom_call.1} parent=1 // pred_check_branch
      %46 = sbr.rel (0) target = $region21
    $region20: #{tpu_custom_call.1} parent=1 // pred_region
      %s48 = ssub.s32 3456, 3456
      %49 = vsyncadd [#allocation8], %s48
      %s50 = sshll.u32 [#allocation9], 4
      %s51 = int_to_ptr.vmem [resolvable:$true] %s50
      %56 = dma.hbm_to_vmem [thread:$0]  %s4, 3456, %s51, [#allocation8], 64, 64, 4
    $region21: #{tpu_custom_call.1} parent=1 // pred_fallthru
      _
    // Predicated region
    $region22: #{tpu_custom_call.1} parent=1 // pred_check
      _
    $region23: #{tpu_custom_call.1} parent=1 // pred_check_branch
      %58 = sbr.rel (0) target = $region25
    $region24: #{tpu_custom_call.1} parent=1 // pred_region
      _
    $region25: #{tpu_custom_call.1} parent=1 // pred_fallthru
      _
    // Predicated region
    $region26: #{tpu_custom_call.1} parent=1 // pred_check
      _
    $region27: #{tpu_custom_call.1} parent=1 // pred_check_branch
      %60 = sbr.rel (0) target = $region29
    $region28: #{tpu_custom_call.1} parent=1 // pred_region
      _
    $region29: #{tpu_custom_call.1} parent=1 // pred_fallthru
      _
    // Predicated region
    $region30: #{tpu_custom_call.1} parent=1 // pred_check
      _
    $region31: #{tpu_custom_call.1} parent=1 // pred_check_branch
      %62 = sbr.rel (0) target = $region33
    $region32: #{tpu_custom_call.1} parent=1 // pred_region
      %s64 = ssub.s32 2048, 2048
      %65 = vsyncadd [#allocation11], %s64
      %s66 = sshll.u32 [#allocation10], 4
      %s67 = int_to_ptr.vmem [resolvable:$true] %s66
      %72 = dma.hbm_to_vmem [thread:$0]  %s7, 2048, %s67, [#allocation11], 128, 128, 8
    $region33: #{tpu_custom_call.1} parent=1 // pred_fallthru
      _
    // Predicated region
    $region34: #{tpu_custom_call.1} parent=1 // pred_check
      _
    $region35: #{tpu_custom_call.1} parent=1 // pred_check_branch
      %74 = sbr.rel (0) target = $region37
    $region36: #{tpu_custom_call.1} parent=1 // pred_region
      %75 = dma.done [#allocation5], 256
    $region37: #{tpu_custom_call.1} parent=1 // pred_fallthru
      _
    // Predicated region
    $region38: #{tpu_custom_call.1} parent=1 // pred_check
      _
    $region39: #{tpu_custom_call.1} parent=1 // pred_check_branch
      %77 = sbr.rel (0) target = $region41
    $region40: #{tpu_custom_call.1} parent=1 // pred_region
      %78 = dma.done [#allocation8], 1728
    $region41: #{tpu_custom_call.1} parent=1 // pred_fallthru
      _
    // Predicated region
    $region42: #{tpu_custom_call.1} parent=1 // pred_check
      _
    $region43: #{tpu_custom_call.1} parent=1 // pred_check_branch
      %80 = sbr.rel (0) target = $region45
    $region44: #{tpu_custom_call.1} parent=1 // pred_region
      %81 = dma.done [#allocation8], 3456
    $region45: #{tpu_custom_call.1} parent=1 // pred_fallthru
      _
    // Predicated region
    $region46: #{tpu_custom_call.1} parent=1 // pred_check
      _
    $region47: #{tpu_custom_call.1} parent=1 // pred_check_branch
      %83 = sbr.rel (0) target = $region49
    $region48: #{tpu_custom_call.1} parent=1 // pred_region
      %84 = dma.done [#allocation11], 2048
    $region49: #{tpu_custom_call.1} parent=1 // pred_fallthru
      _
    %vm86 = vcmask 584704
    %87 = vst.msk [vmem:[#allocation2] sm:$0xf] %vm86, 0
    %88 = vst.msk [vmem:[#allocation2 + $0x4] sm:$0xf] %vm86, 0
    %vm89 = vcmask 581632
    %90 = vst.msk [vmem:[#allocation2 + $0x8] sm:$0x1] %vm89, 0
    %91 = vst.msk [vmem:[#allocation2 + $0xc] sm:$0xf] %vm86, 0
    %92 = vst.msk [vmem:[#allocation2 + $0x10] sm:$0xf] %vm86, 0
    %93 = vst.msk [vmem:[#allocation2 + $0x14] sm:$0x1] %vm89, 0
    %v94 = vld [vmem:[#allocation4] sm:$0xf]
    %v95 = vld [vmem:[#allocation4 + $0x4] sm:$0xf]
    %v96 = vld [vmem:[#allocation4 + $0x8] sm:$0xf]
    %v97 = vld [vmem:[#allocation4 + $0xc] sm:$0xf]
    %vm98 = vsmask.f32 256
    %vm99 = vsmask.f32 4368
    %vm100 = vmor %vm98, %vm99
    %v102 = vshrl.u32 %v94, 16
    %v104 = vrot.slane %v102, 7
    %v105 = vshll.u32 %v94, 16
    %v107 = vor.u32 %v104, %v105
    %v108 = vrot.slane %v104, 4
    %v110 = vshrl.u32 %v95, 16
    %v112 = vrot.slane %v110, 7
    %v113 = vshll.u32 %v95, 16
    %v115 = vor.u32 %v112, %v113
    %v116 = vsel %vm100, %v108, %v115
    %v117 = vrot.slane %v112, 4
    %v119 = vshrl.u32 %v96, 16
    %v121 = vrot.slane %v119, 7
    %v122 = vshll.u32 %v96, 16
    %v124 = vor.u32 %v121, %v122
    %v125 = vrot.slane %v121, 4
    %v127 = vshrl.u32 %v97, 16
    %v129 = vrot.slane %v127, 7
    %v130 = vshll.u32 %v97, 16
    %v132 = vor.u32 %v129, %v130
    %v133 = vsel %vm100, %v125, %v132
    %v134 = vrot.slane %v129, 4
    %135 = vrot.lane.b32.xlu0 %v107, 4
    %v136 = vpop.permute.xlu0 %135
    %137 = vrot.lane.b32.xlu0 %v116, 4
    %v138 = vpop.permute.xlu0 %137
    %139 = vrot.lane.b32.xlu0 %v117, 4
    %v140 = vpop.permute.xlu0 %139
    %141 = vrot.lane.b32.xlu0 %v124, 4
    %v142 = vpop.permute.xlu0 %141
    %143 = vrot.lane.b32.xlu0 %v133, 4
    %v144 = vpop.permute.xlu0 %143
    %145 = vrot.lane.b32.xlu0 %v134, 4
    %v146 = vpop.permute.xlu0 %145
    %vm153 = vcmask 551968
    %vm154 = vsmask.f32 7938
    %vm155 = vmand %vm153, %vm154
    %v156 = vld [vmem:[#allocation2] sm:$0xf]
    %v157 = vsel %vm155, %v136, %v156
    %158 = vst [vmem:[#allocation2] sm:$0xf] %v157
    %vm159 = vcmask 551968
    %160 = vst.msk [vmem:[#allocation2 + $0x4] sm:$0xf] %vm159, %v138
    %vm161 = vcmask 548896
    %vm162 = vmand %vm161, %vm98
    %v163 = vld [vmem:[#allocation2 + $0x8] sm:$0x1]
    %v164 = vsel %vm162, %v140, %v163
    %165 = vst [vmem:[#allocation2 + $0x8] sm:$0x1] %v164
    %v166 = vld [vmem:[#allocation2 + $0xc] sm:$0xf]
    %v167 = vsel %vm155, %v142, %v166
    %168 = vst [vmem:[#allocation2 + $0xc] sm:$0xf] %v167
    %169 = vst.msk [vmem:[#allocation2 + $0x10] sm:$0xf] %vm159, %v144
    %v170 = vld [vmem:[#allocation2 + $0x14] sm:$0x1]
    %v171 = vsel %vm162, %v146, %v170
    %172 = vst [vmem:[#allocation2 + $0x14] sm:$0x1] %v171
    %v173 = vld [vmem:[#allocation2] sm:$0xf]
    %v174 = vld [vmem:[#allocation2 + $0x4] sm:$0xf]
    %v175 = vld [vmem:[#allocation2 + $0xc] sm:$0xf]
    %v176 = vld [vmem:[#allocation2 + $0x10] sm:$0xf]
    %v177 = vld [vmem:[#allocation7] sm:$0xf]
    %v178 = vld [vmem:[#allocation7 + $0x4] sm:$0xf]
    %v179 = vld [vmem:[#allocation7 + $0x8] sm:$0xf]
    %v180 = vld [vmem:[#allocation7 + $0xc] sm:$0xf]
    %v181 = vld [vmem:[#allocation7 + $0x10] sm:$0xf]
    %v182 = vld [vmem:[#allocation7 + $0x14] sm:$0xf]
    %v183 = vld [vmem:[#allocation7 + $0x18] sm:$0xf]
    %v184 = vld [vmem:[#allocation7 + $0x1c] sm:$0xf]
    %v185 = vld [vmem:[#allocation7 + $0x20] sm:$0xf]
    %v186 = vld [vmem:[#allocation2 + $0x8] sm:$0x1]
    %v187 = vld [vmem:[#allocation2 + $0x14] sm:$0x1]
    %vm188 = vsmask.f32 3328
    %vm189 = vsmask.f32 7440
    %vm190 = vmor %vm188, %vm189
    %v192 = vshrl.u32 %v173, 16
    %v194 = vrot.slane %v192, 4
    %v195 = vshll.u32 %v173, 16
    %v197 = vrot.slane %v195, 5
    %v198 = vor.u32 %v194, %v197
    %v199 = vrot.slane %v198, 4
    %v201 = vshll.u32 %v174, 16
    %v203 = vrot.slane %v201, 5
    %v204 = vsel %vm190, %v199, %v203
    %v205 = vshrl.u32 %v174, 16
    %v207 = vrot.slane %v205, 4
    %v208 = vor.u32 %v207, %v203
    %v209 = vrot.slane %v208, 4
    %v211 = vshll.u32 %v186, 16
    %v213 = vrot.slane %v211, 5
    %v214 = vsel %vm190, %v209, %v213
    %v216 = vshrl.u32 %v175, 16
    %v218 = vrot.slane %v216, 4
    %v219 = vshll.u32 %v175, 16
    %v221 = vrot.slane %v219, 5
    %v222 = vor.u32 %v218, %v221
    %v223 = vrot.slane %v222, 4
    %v225 = vshll.u32 %v176, 16
    %v227 = vrot.slane %v225, 5
    %v228 = vsel %vm190, %v223, %v227
    %v229 = vshrl.u32 %v176, 16
    %v231 = vrot.slane %v229, 4
    %v232 = vor.u32 %v231, %v227
    %v233 = vrot.slane %v232, 4
    %v235 = vshll.u32 %v187, 16
    %v237 = vrot.slane %v235, 5
    %v238 = vsel %vm190, %v233, %v237
    %s239 = scalar_lea.vmem [#allocation7], 36
    %v240 = vld [vmem:[%s239] sm:$0xf]
    %v241 = vld [vmem:[%s239 + $0x4] sm:$0xf]
    %v242 = vld [vmem:[%s239 + $0x8] sm:$0xf]
    %v243 = vld [vmem:[%s239 + $0xc] sm:$0xf]
    %v244 = vld [vmem:[%s239 + $0x10] sm:$0xf]
    %v245 = vld [vmem:[%s239 + $0x14] sm:$0xf]
    %v246 = vld [vmem:[%s239 + $0x18] sm:$0xf]
    %v247 = vld [vmem:[%s239 + $0x1c] sm:$0xf]
    %v248 = vld [vmem:[%s239 + $0x20] sm:$0xf]
    %v249 = vunpack.c.l.b16 %v204
    %v250 = vunpack.c.l.b16 %v214
    %v251 = vunpack.c.l.b16 %v228
    %v252 = vunpack.c.l.b16 %v238
    %v253 = vpack.c.b16 %v250, %v249
    %v254 = vpack.c.b16 %v252, %v251
    %v264 = vunpack.c.l.b16 %v240
    %v265 = vunpack.c.l.b16 %v241
    %v266 = vunpack.c.l.b16 %v242
    %v267 = vunpack.c.l.b16 %v243
    %v268 = vunpack.c.l.b16 %v244
    %v269 = vunpack.c.l.b16 %v245
    %v270 = vunpack.c.l.b16 %v246
    %v271 = vunpack.c.l.b16 %v247
    %v272 = vunpack.c.l.b16 %v248
    %v273 = vpack.c.b16 %v265, %v264
    %v274 = vpack.c.b16 %v267, %v266
    %v275 = vpack.c.b16 %v269, %v268
    %v276 = vpack.c.b16 %v271, %v270
    %v277 = vpack.c.b16 %v272, %v272
    %vm282 = vcmask 588800
    %v284 = vsel %vm282, %v253, 0
    %v287 = vsel %vm282, %v254, 0
    %vm289 = vcmask 1043456
    %v291 = vsel %vm289, %v277, 0
    %293 = vmatprep.subr.bf16.mxu0 0
    %294 = vmatpush1.bf16.msra.mxu0 %v273
    %295 = vmatprep.subr.bf16.mxu0 0
    %296 = vmatpush1.bf16.msra.mxu0 %v274
    %297 = vmatprep.subr.bf16.mxu0 0
    %298 = vmatpush1.bf16.msra.mxu0 %v275
    %299 = vmatprep.subr.bf16.mxu0 0
    %300 = vmatpush1.bf16.msra.mxu0 %v276
    %301 = vmatprep.subr.bf16.mxu0 0
    %302 = vmatpush1.bf16.msra.mxu0 %v291
    %303 = vmatprep.subr.bf16.mxu0 0
    %304 = vmatpush1.bf16.msra.mxu0 0
    %305 = vmatprep.subr.bf16.mxu0 0
    %306 = vmatpush1.bf16.msra.mxu0 0
    %307 = vmatprep.subr.bf16.mxu0 0
    %308 = vmatpush1.bf16.msra.mxu0 0
    %309 = vmatprep.subr.bf16.mxu0 0
    %310 = vmatpush1.bf16.msra.mxu0 0
    %311 = vmatprep.subr.bf16.mxu0 0
    %312 = vmatpush1.bf16.msra.mxu0 0
    %313 = vmatprep.subr.bf16.mxu0 0
    %314 = vmatpush1.bf16.msra.mxu0 0
    %315 = vmatprep.subr.bf16.mxu0 0
    %316 = vmatpush1.bf16.msra.mxu0 0
    %317 = vmatprep.subr.bf16.mxu0 0
    %318 = vmatpush1.bf16.msra.mxu0 0
    %319 = vmatprep.subr.bf16.mxu0 0
    %320 = vmatpush1.bf16.msra.mxu0 0
    %321 = vmatprep.subr.bf16.mxu0 0
    %322 = vmatpush1.bf16.msra.mxu0 0
    %323 = vmatprep.subr.bf16.mxu0 0
    %324 = vmatpush1.bf16.msra.mxu0 0
    %325 = vmatprep.mubr.bf16.mxu0 0
    %326 = vmatmul.mubr.bf16.gmra.mrb[0].mxu0 %v284
    %v327 = vpop.f32.mrb[0].mxu0
    %v328 = vadd.f32 0.0, %v327
    %v329 = vpop.f32.mrb[0].mxu0
    %v330 = vpop.f32.mrb[0].mxu0
    %v331 = vadd.f32 0.0, %v330
    %v332 = vpop.f32.mrb[0].mxu0
    %333 = vmatprep.mubr.bf16.mxu0 0
    %334 = vmatmul.mubr.bf16.gmra.mrb[0].mxu0 %v287
    %v335 = vpop.f32.mrb[0].mxu0
    %v336 = vadd.f32 0.0, %v335
    %v337 = vpop.f32.mrb[0].mxu0
    %v338 = vpop.f32.mrb[0].mxu0
    %v339 = vadd.f32 0.0, %v338
    %v340 = vpop.f32.mrb[0].mxu0
    %341 = vdwg.mxu0
    %v346 = vunpack.c.l.b16 %v173
    %v347 = vunpack.c.l.b16 %v174
    %v348 = vunpack.c.l.b16 %v175
    %v349 = vunpack.c.l.b16 %v176
    %v350 = vpack.c.b16 %v347, %v346
    %v351 = vpack.c.b16 %v349, %v348
    %v361 = vunpack.c.l.b16 %v177
    %v362 = vunpack.c.l.b16 %v178
    %v363 = vunpack.c.l.b16 %v179
    %v364 = vunpack.c.l.b16 %v180
    %v365 = vunpack.c.l.b16 %v181
    %v366 = vunpack.c.l.b16 %v182
    %v367 = vunpack.c.l.b16 %v183
    %v368 = vunpack.c.l.b16 %v184
    %v369 = vunpack.c.l.b16 %v185
    %v370 = vpack.c.b16 %v362, %v361
    %v371 = vpack.c.b16 %v364, %v363
    %v372 = vpack.c.b16 %v366, %v365
    %v373 = vpack.c.b16 %v368, %v367
    %v374 = vpack.c.b16 %v369, %v369
    %v380 = vsel %vm282, %v350, 0
    %v383 = vsel %vm282, %v351, 0
    %v386 = vsel %vm289, %v374, 0
    %388 = vmatprep.subr.bf16.mxu0 0
    %389 = vmatpush1.bf16.msra.mxu0 %v370
    %390 = vmatprep.subr.bf16.mxu0 0
    %391 = vmatpush1.bf16.msra.mxu0 %v371
    %392 = vmatprep.subr.bf16.mxu0 0
    %393 = vmatpush1.bf16.msra.mxu0 %v372
    %394 = vmatprep.subr.bf16.mxu0 0
    %395 = vmatpush1.bf16.msra.mxu0 %v373
    %396 = vmatprep.subr.bf16.mxu0 0
    %397 = vmatpush1.bf16.msra.mxu0 %v386
    %398 = vmatprep.subr.bf16.mxu0 0
    %399 = vmatpush1.bf16.msra.mxu0 0
    %400 = vmatprep.subr.bf16.mxu0 0
    %401 = vmatpush1.bf16.msra.mxu0 0
    %402 = vmatprep.subr.bf16.mxu0 0
    %403 = vmatpush1.bf16.msra.mxu0 0
    %404 = vmatprep.subr.bf16.mxu0 0
    %405 = vmatpush1.bf16.msra.mxu0 0
    %406 = vmatprep.subr.bf16.mxu0 0
    %407 = vmatpush1.bf16.msra.mxu0 0
    %408 = vmatprep.subr.bf16.mxu0 0
    %409 = vmatpush1.bf16.msra.mxu0 0
    %410 = vmatprep.subr.bf16.mxu0 0
    %411 = vmatpush1.bf16.msra.mxu0 0
    %412 = vmatprep.subr.bf16.mxu0 0
    %413 = vmatpush1.bf16.msra.mxu0 0
    %414 = vmatprep.subr.bf16.mxu0 0
    %415 = vmatpush1.bf16.msra.mxu0 0
    %416 = vmatprep.subr.bf16.mxu0 0
    %417 = vmatpush1.bf16.msra.mxu0 0
    %418 = vmatprep.subr.bf16.mxu0 0
    %419 = vmatpush1.bf16.msra.mxu0 0
    %420 = vmatprep.mubr.bf16.mxu0 0
    %421 = vmatmul.mubr.bf16.gmra.mrb[0].mxu0 %v380
    %v422 = vpop.f32.mrb[0].mxu0
    %v423 = vadd.f32 %v328, %v422
    %v424 = vpop.f32.mrb[0].mxu0
    %v425 = vpop.f32.mrb[0].mxu0
    %v426 = vadd.f32 %v331, %v425
    %v427 = vpop.f32.mrb[0].mxu0
    %428 = vmatprep.mubr.bf16.mxu0 0
    %429 = vmatmul.mubr.bf16.gmra.mrb[0].mxu0 %v383
    %v430 = vpop.f32.mrb[0].mxu0
    %v431 = vadd.f32 %v336, %v430
    %v432 = vpop.f32.mrb[0].mxu0
    %v433 = vpop.f32.mrb[0].mxu0
    %v434 = vadd.f32 %v339, %v433
    %v435 = vpop.f32.mrb[0].mxu0
    %436 = vdwg.mxu0
    %v437 = vld [vmem:[#allocation2] sm:$0xe]
    %v438 = vld [vmem:[#allocation2 + $0xc] sm:$0xe]
    %vm443 = vcmask 1042432
    %vm444 = vcmask 1046532
    %vm445 = vmor %vm443, %vm444
    %v446 = vrot.slane %v437, 5
    %v447 = vrot.slane %v446, 4
    %v448 = vrot.slane %v174, 5
    %v449 = vsel %vm445, %v447, %v448
    %v450 = vrot.slane %v448, 4
    %v451 = vrot.slane %v186, 5
    %v452 = vsel %vm445, %v450, %v451
    %v453 = vrot.slane %v438, 5
    %v454 = vrot.slane %v453, 4
    %v455 = vrot.slane %v176, 5
    %v456 = vsel %vm445, %v454, %v455
    %v457 = vrot.slane %v455, 4
    %v458 = vrot.slane %v187, 5
    %v459 = vsel %vm445, %v457, %v458
    %s460 = scalar_lea.vmem [#allocation7], 72
    %v461 = vld [vmem:[%s460] sm:$0xf]
    %v462 = vld [vmem:[%s460 + $0x4] sm:$0xf]
    %v463 = vld [vmem:[%s460 + $0x8] sm:$0xf]
    %v464 = vld [vmem:[%s460 + $0xc] sm:$0xf]
    %v465 = vld [vmem:[%s460 + $0x10] sm:$0xf]
    %v466 = vld [vmem:[%s460 + $0x14] sm:$0xf]
    %v467 = vld [vmem:[%s460 + $0x18] sm:$0xf]
    %v468 = vld [vmem:[%s460 + $0x1c] sm:$0xf]
    %v469 = vld [vmem:[%s460 + $0x20] sm:$0xf]
    %v470 = vunpack.c.l.b16 %v449
    %v471 = vunpack.c.l.b16 %v452
    %v472 = vunpack.c.l.b16 %v456
    %v473 = vunpack.c.l.b16 %v459
    %v474 = vpack.c.b16 %v471, %v470
    %v475 = vpack.c.b16 %v473, %v472
    %v485 = vunpack.c.l.b16 %v461
    %v486 = vunpack.c.l.b16 %v462
    %v487 = vunpack.c.l.b16 %v463
    %v488 = vunpack.c.l.b16 %v464
    %v489 = vunpack.c.l.b16 %v465
    %v490 = vunpack.c.l.b16 %v466
    %v491 = vunpack.c.l.b16 %v467
    %v492 = vunpack.c.l.b16 %v468
    %v493 = vunpack.c.l.b16 %v469
    %v494 = vpack.c.b16 %v486, %v485
    %v495 = vpack.c.b16 %v488, %v487
    %v496 = vpack.c.b16 %v490, %v489
    %v497 = vpack.c.b16 %v492, %v491
    %v498 = vpack.c.b16 %v493, %v493
    %v504 = vsel %vm282, %v474, 0
    %v507 = vsel %vm282, %v475, 0
    %v510 = vsel %vm289, %v498, 0
    %512 = vmatprep.subr.bf16.mxu0 0
    %513 = vmatpush1.bf16.msra.mxu0 %v494
    %514 = vmatprep.subr.bf16.mxu0 0
    %515 = vmatpush1.bf16.msra.mxu0 %v495
    %516 = vmatprep.subr.bf16.mxu0 0
    %517 = vmatpush1.bf16.msra.mxu0 %v496
    %518 = vmatprep.subr.bf16.mxu0 0
    %519 = vmatpush1.bf16.msra.mxu0 %v497
    %520 = vmatprep.subr.bf16.mxu0 0
    %521 = vmatpush1.bf16.msra.mxu0 %v510
    %522 = vmatprep.subr.bf16.mxu0 0
    %523 = vmatpush1.bf16.msra.mxu0 0
    %524 = vmatprep.subr.bf16.mxu0 0
    %525 = vmatpush1.bf16.msra.mxu0 0
    %526 = vmatprep.subr.bf16.mxu0 0
    %527 = vmatpush1.bf16.msra.mxu0 0
    %528 = vmatprep.subr.bf16.mxu0 0
    %529 = vmatpush1.bf16.msra.mxu0 0
    %530 = vmatprep.subr.bf16.mxu0 0
    %531 = vmatpush1.bf16.msra.mxu0 0
    %532 = vmatprep.subr.bf16.mxu0 0
    %533 = vmatpush1.bf16.msra.mxu0 0
    %534 = vmatprep.subr.bf16.mxu0 0
    %535 = vmatpush1.bf16.msra.mxu0 0
    %536 = vmatprep.subr.bf16.mxu0 0
    %537 = vmatpush1.bf16.msra.mxu0 0
    %538 = vmatprep.subr.bf16.mxu0 0
    %539 = vmatpush1.bf16.msra.mxu0 0
    %540 = vmatprep.subr.bf16.mxu0 0
    %541 = vmatpush1.bf16.msra.mxu0 0
    %542 = vmatprep.subr.bf16.mxu0 0
    %543 = vmatpush1.bf16.msra.mxu0 0
    %544 = vmatprep.mubr.bf16.mxu0 0
    %545 = vmatmul.mubr.bf16.gmra.mrb[0].mxu0 %v504
    %v546 = vpop.f32.mrb[0].mxu0
    %v547 = vadd.f32 0.0, %v546
    %v548 = vpop.f32.mrb[0].mxu0
    %v549 = vpop.f32.mrb[0].mxu0
    %v550 = vadd.f32 0.0, %v549
    %v551 = vpop.f32.mrb[0].mxu0
    %552 = vmatprep.mubr.bf16.mxu0 0
    %553 = vmatmul.mubr.bf16.gmra.mrb[0].mxu0 %v507
    %v554 = vpop.f32.mrb[0].mxu0
    %v555 = vadd.f32 0.0, %v554
    %v556 = vpop.f32.mrb[0].mxu0
    %v557 = vpop.f32.mrb[0].mxu0
    %v558 = vadd.f32 0.0, %v557
    %v559 = vpop.f32.mrb[0].mxu0
    %560 = vdwg.mxu0
    %v561 = vadd.f32 %v423, %v547
    %v562 = vadd.f32 %v426, %v550
    %v563 = vadd.f32 %v431, %v555
    %v564 = vadd.f32 %v434, %v558
    %v565 = vld [vmem:[%s2] sm:$0x1]
    %v566 = vld [vmem:[%s3] sm:$0x1]
    %v567 = vadd.f32 %v561, %v562
    %v568 = vadd.f32 %v567, %v563
    %v569 = vadd.f32 %v568, %v564
    %v570 = vrot.slane %v569, 4
    %v571 = vadd.f32 %v569, %v570
    %v572 = vrot.slane %v571, 2
    %v573 = vadd.f32 %v571, %v572
    %v574 = vrot.slane %v573, 1
    %v575 = vadd.f32 %v573, %v574
    %v576 = vld [vmem:[#allocation10] sm:$0xff]
    %v577 = vld [vmem:[#allocation10 + $0x8] sm:$0xff]
    %v578 = vld [vmem:[#allocation10 + $0x10] sm:$0xff]
    %v579 = vld [vmem:[#allocation10 + $0x18] sm:$0xff]
    %v580 = vld [vmem:[#allocation10 + $0x20] sm:$0xff]
    %v581 = vld [vmem:[#allocation10 + $0x28] sm:$0xff]
    %v582 = vld [vmem:[#allocation10 + $0x30] sm:$0xff]
    %v583 = vld [vmem:[#allocation10 + $0x38] sm:$0xff]
    %v584 = vld [vmem:[#allocation10 + $0x40] sm:$0xff]
    %v585 = vld [vmem:[#allocation10 + $0x48] sm:$0xff]
    %v586 = vld [vmem:[#allocation10 + $0x50] sm:$0xff]
    %v587 = vld [vmem:[#allocation10 + $0x58] sm:$0xff]
    %v588 = vld [vmem:[#allocation10 + $0x60] sm:$0xff]
    %v589 = vld [vmem:[#allocation10 + $0x68] sm:$0xff]
    %v590 = vld [vmem:[#allocation10 + $0x70] sm:$0xff]
    %v591 = vld [vmem:[#allocation10 + $0x78] sm:$0xff]
    %592 = vmatprep.subr.mxu0 0.0
    %593 = vmatpush1.msra.mxu0 %v576
    %594 = vmatprep.subr.mxu0 0.0
    %595 = vmatpush1.msra.mxu0 %v577
    %596 = vmatprep.subr.mxu0 0.0
    %597 = vmatpush1.msra.mxu0 %v578
    %598 = vmatprep.subr.mxu0 0.0
    %599 = vmatpush1.msra.mxu0 %v579
    %600 = vmatprep.subr.mxu0 0.0
    %601 = vmatpush1.msra.mxu0 %v580
    %602 = vmatprep.subr.mxu0 0.0
    %603 = vmatpush1.msra.mxu0 %v581
    %604 = vmatprep.subr.mxu0 0.0
    %605 = vmatpush1.msra.mxu0 %v582
    %606 = vmatprep.subr.mxu0 0.0
    %607 = vmatpush1.msra.mxu0 %v583
    %608 = vmatprep.subr.mxu0 0.0
    %609 = vmatpush1.msra.mxu0 %v584
    %610 = vmatprep.subr.mxu0 0.0
    %611 = vmatpush1.msra.mxu0 %v585
    %612 = vmatprep.subr.mxu0 0.0
    %613 = vmatpush1.msra.mxu0 %v586
    %614 = vmatprep.subr.mxu0 0.0
    %615 = vmatpush1.msra.mxu0 %v587
    %616 = vmatprep.subr.mxu0 0.0
    %617 = vmatpush1.msra.mxu0 %v588
    %618 = vmatprep.subr.mxu0 0.0
    %619 = vmatpush1.msra.mxu0 %v589
    %620 = vmatprep.subr.mxu0 0.0
    %621 = vmatpush1.msra.mxu0 %v590
    %622 = vmatprep.subr.mxu0 0.0
    %623 = vmatpush1.msra.mxu0 %v591
    %624 = vmatprep.subr.mxu0 0.0
    %625 = vmatpush1.msra.mxu0 0.0
    %626 = vmatprep.subr.mxu0 0.0
    %627 = vmatpush1.msra.mxu0 0.0
    %628 = vmatprep.subr.mxu0 0.0
    %629 = vmatpush1.msra.mxu0 0.0
    %630 = vmatprep.subr.mxu0 0.0
    %631 = vmatpush1.msra.mxu0 0.0
    %632 = vmatprep.subr.mxu0 0.0
    %633 = vmatpush1.msra.mxu0 0.0
    %634 = vmatprep.subr.mxu0 0.0
    %635 = vmatpush1.msra.mxu0 0.0
    %636 = vmatprep.subr.mxu0 0.0
    %637 = vmatpush1.msra.mxu0 0.0
    %638 = vmatprep.subr.mxu0 0.0
    %639 = vmatpush1.msra.mxu0 0.0
    %640 = vmatprep.subr.mxu0 0.0
    %641 = vmatpush1.msra.mxu0 0.0
    %642 = vmatprep.subr.mxu0 0.0
    %643 = vmatpush1.msra.mxu0 0.0
    %644 = vmatprep.subr.mxu0 0.0
    %645 = vmatpush1.msra.mxu0 0.0
    %646 = vmatprep.subr.mxu0 0.0
    %647 = vmatpush1.msra.mxu0 0.0
    %648 = vmatprep.subr.mxu0 0.0
    %649 = vmatpush1.msra.mxu0 0.0
    %650 = vmatprep.subr.mxu0 0.0
    %651 = vmatpush1.msra.mxu0 0.0
    %652 = vmatprep.subr.mxu0 0.0
    %653 = vmatpush1.msra.mxu0 0.0
    %654 = vmatprep.subr.mxu0 0.0
    %655 = vmatpush1.msra.mxu0 0.0
    %656 = vmatprep.mubr.f32.mxu0 0.0
    %657 = vmatmul.mubr.f32.gmra.mrb[0].mxu0 %v575
    %v658 = vpop.f32.mrb[0].mxu0
    %v659 = vadd.f32 0.0, %v658
    %v660 = vpop.f32.mrb[0].mxu0
    %661 = vdwg.mxu0
    %v662 = vlaneseq
    %v663 = vshrl.u32 %v662, 7
    %v664 = vsub.s32 0, %v663
    %v665 = vrot.slane %v659, %v664
    %v666 = vsub.f32 %v561, %v665
    %v667 = vsub.f32 %v562, %v665
    %v668 = vsub.f32 %v563, %v665
    %v669 = vsub.f32 %v564, %v665
    %v670 = vmul.f32 %v666, %v666
    %v671 = vmul.f32 %v667, %v667
    %v672 = vmul.f32 %v668, %v668
    %v673 = vmul.f32 %v669, %v669
    %v674 = vadd.f32 %v670, %v671
    %v675 = vadd.f32 %v674, %v672
    %v676 = vadd.f32 %v675, %v673
    %v677 = vrot.slane %v676, 4
    %v678 = vadd.f32 %v676, %v677
    %v679 = vrot.slane %v678, 2
    %v680 = vadd.f32 %v678, %v679
    %v681 = vrot.slane %v680, 1
    %v682 = vadd.f32 %v680, %v681
    %683 = vmatprep.subr.mxu0 0.0
    %684 = vmatpush1.msra.mxu0 %v576
    %685 = vmatprep.subr.mxu0 0.0
    %686 = vmatpush1.msra.mxu0 %v577
    %687 = vmatprep.subr.mxu0 0.0
    %688 = vmatpush1.msra.mxu0 %v578
    %689 = vmatprep.subr.mxu0 0.0
    %690 = vmatpush1.msra.mxu0 %v579
    %691 = vmatprep.subr.mxu0 0.0
    %692 = vmatpush1.msra.mxu0 %v580
    %693 = vmatprep.subr.mxu0 0.0
    %694 = vmatpush1.msra.mxu0 %v581
    %695 = vmatprep.subr.mxu0 0.0
    %696 = vmatpush1.msra.mxu0 %v582
    %697 = vmatprep.subr.mxu0 0.0
    %698 = vmatpush1.msra.mxu0 %v583
    %699 = vmatprep.subr.mxu0 0.0
    %700 = vmatpush1.msra.mxu0 %v584
    %701 = vmatprep.subr.mxu0 0.0
    %702 = vmatpush1.msra.mxu0 %v585
    %703 = vmatprep.subr.mxu0 0.0
    %704 = vmatpush1.msra.mxu0 %v586
    %705 = vmatprep.subr.mxu0 0.0
    %706 = vmatpush1.msra.mxu0 %v587
    %707 = vmatprep.subr.mxu0 0.0
    %708 = vmatpush1.msra.mxu0 %v588
    %709 = vmatprep.subr.mxu0 0.0
    %710 = vmatpush1.msra.mxu0 %v589
    %711 = vmatprep.subr.mxu0 0.0
    %712 = vmatpush1.msra.mxu0 %v590
    %713 = vmatprep.subr.mxu0 0.0
    %714 = vmatpush1.msra.mxu0 %v591
    %715 = vmatprep.subr.mxu0 0.0
    %716 = vmatpush1.msra.mxu0 0.0
    %717 = vmatprep.subr.mxu0 0.0
    %718 = vmatpush1.msra.mxu0 0.0
    %719 = vmatprep.subr.mxu0 0.0
    %720 = vmatpush1.msra.mxu0 0.0
    %721 = vmatprep.subr.mxu0 0.0
    %722 = vmatpush1.msra.mxu0 0.0
    %723 = vmatprep.subr.mxu0 0.0
    %724 = vmatpush1.msra.mxu0 0.0
    %725 = vmatprep.subr.mxu0 0.0
    %726 = vmatpush1.msra.mxu0 0.0
    %727 = vmatprep.subr.mxu0 0.0
    %728 = vmatpush1.msra.mxu0 0.0
    %729 = vmatprep.subr.mxu0 0.0
    %730 = vmatpush1.msra.mxu0 0.0
    %731 = vmatprep.subr.mxu0 0.0
    %732 = vmatpush1.msra.mxu0 0.0
    %733 = vmatprep.subr.mxu0 0.0
    %734 = vmatpush1.msra.mxu0 0.0
    %735 = vmatprep.subr.mxu0 0.0
    %736 = vmatpush1.msra.mxu0 0.0
    %737 = vmatprep.subr.mxu0 0.0
    %738 = vmatpush1.msra.mxu0 0.0
    %739 = vmatprep.subr.mxu0 0.0
    %740 = vmatpush1.msra.mxu0 0.0
    %741 = vmatprep.subr.mxu0 0.0
    %742 = vmatpush1.msra.mxu0 0.0
    %743 = vmatprep.subr.mxu0 0.0
    %744 = vmatpush1.msra.mxu0 0.0
    %745 = vmatprep.subr.mxu0 0.0
    %746 = vmatpush1.msra.mxu0 0.0
    %747 = vmatprep.mubr.f32.mxu0 0.0
    %748 = vmatmul.mubr.f32.gmra.mrb[0].mxu0 %v682
    %v749 = vpop.f32.mrb[0].mxu0
    %v750 = vadd.f32 1e-05, %v749
    %v751 = vpop.f32.mrb[0].mxu0
    %752 = vdwg.mxu0
    %v753 = vrsqrt.pop %v750
    %v754 = vmul.f32 %v565, %v753
    %v755 = vmul.f32 %v659, %v754
    %v756 = vsub.f32 %v566, %v755
    %v758 = vlaneseq
    %v759 = vshrl.u32 %v758, 7
    %v760 = vsub.s32 0, %v759
    %v761 = vrot.slane %v754, %v760
    %v763 = vmul.f32 %v561, %v761
    %v764 = vmul.f32 %v562, %v761
    %v765 = vmul.f32 %v563, %v761
    %v766 = vmul.f32 %v564, %v761
    %v768 = vlaneseq
    %v769 = vshrl.u32 %v768, 7
    %v770 = vsub.s32 0, %v769
    %v771 = vrot.slane %v756, %v770
    %v773 = vadd.f32 %v763, %v771
    %v774 = vadd.f32 %v764, %v771
    %v775 = vadd.f32 %v765, %v771
    %v776 = vadd.f32 %v766, %v771
    %v777 = vmax.f32 %v773, 0.0
    %v778 = vmax.f32 %v774, 0.0
    %v779 = vmax.f32 %v775, 0.0
    %v780 = vmax.f32 %v776, 0.0
    %vm781 = vcmask 130052
    %vm782 = vmor %vm781, %vm289
    %783 = vst.msk [vmem:[#allocation3] sm:$0xff] %vm782, 0
    %784 = vst.msk [vmem:[#allocation3 + $0x8] sm:$0xff] %vm782, 0
    %vm785 = vcmask 1040384
    %vm786 = vcmask 126980
    %vm787 = vmor %vm786, %vm785
    %788 = vst.msk [vmem:[#allocation3 + $0x10] sm:$0x11] %vm787, 0
    %789 = vst.msk [vmem:[#allocation3 + $0x18] sm:$0xff] %vm782, 0
    %790 = vst.msk [vmem:[#allocation3 + $0x20] sm:$0xff] %vm782, 0
    %791 = vst.msk [vmem:[#allocation3 + $0x28] sm:$0x11] %vm787, 0
    %v792 = vpack.c.bf16 %v778, %v777
    %v793 = vpack.c.bf16 %v780, %v779
    %v796 = vunpack.c.l.b16 %v792
    %v797 = vunpack.c.h.b16 %v792
    %v798 = vunpack.c.l.b16 %v793
    %v799 = vunpack.c.h.b16 %v793
    %v800 = vpack.c.b16 %v796, %v796
    %v801 = vpack.c.b16 %v797, %v797
    %v802 = vpack.c.b16 %v798, %v798
    %v803 = vpack.c.b16 %v799, %v799
    %v805 = vshrl.u32 %v800, 16
    %v807 = vrot.slane %v805, 7
    %v808 = vshll.u32 %v800, 16
    %v810 = vor.u32 %v807, %v808
    %v811 = vrot.slane %v807, 4
    %v813 = vshrl.u32 %v801, 16
    %v815 = vrot.slane %v813, 7
    %v816 = vshll.u32 %v801, 16
    %v818 = vor.u32 %v815, %v816
    %v819 = vsel %vm100, %v811, %v818
    %v820 = vrot.slane %v815, 4
    %v822 = vshrl.u32 %v802, 16
    %v824 = vrot.slane %v822, 7
    %v825 = vshll.u32 %v802, 16
    %v827 = vor.u32 %v824, %v825
    %v828 = vrot.slane %v824, 4
    %v830 = vshrl.u32 %v803, 16
    %v832 = vrot.slane %v830, 7
    %v833 = vshll.u32 %v803, 16
    %v835 = vor.u32 %v832, %v833
    %v836 = vsel %vm100, %v828, %v835
    %v837 = vrot.slane %v832, 4
    %838 = vrot.lane.b32.xlu0 %v810, 8
    %v839 = vpop.permute.xlu0 %838
    %840 = vrot.lane.b32.xlu0 %v819, 8
    %v841 = vpop.permute.xlu0 %840
    %842 = vrot.lane.b32.xlu0 %v820, 8
    %v843 = vpop.permute.xlu0 %842
    %844 = vrot.lane.b32.xlu0 %v827, 8
    %v845 = vpop.permute.xlu0 %844
    %846 = vrot.lane.b32.xlu0 %v836, 8
    %v847 = vpop.permute.xlu0 %846
    %848 = vrot.lane.b32.xlu0 %v837, 8
    %v849 = vpop.permute.xlu0 %848
    %v850 = vrot.slane %v839, 4
    %v851 = vrot.slane %v841, 4
    %v852 = vrot.slane %v843, 4
    %v853 = vrot.slane %v845, 4
    %v854 = vrot.slane %v847, 4
    %v855 = vrot.slane %v849, 4
    %vm856 = vcmask 64512
    %v857 = vsel %vm856, %v850, %v839
    %v858 = vsel %vm856, %v851, %v841
    %v859 = vsel %vm856, %v852, %v843
    %v860 = vsel %vm856, %v853, %v845
    %v861 = vsel %vm856, %v854, %v847
    %v862 = vsel %vm856, %v855, %v849
    %vm869 = vcmask 1043520
    %vm870 = vmand %vm869, %vm154
    %vm871 = vcmask 64516
    %vm872 = vsmask.f32 7954
    %vm873 = vmand %vm871, %vm872
    %vm874 = vmor %vm873, %vm870
    %v875 = vld [vmem:[#allocation3] sm:$0xff]
    %v876 = vsel %vm874, %v857, %v875
    %877 = vst [vmem:[#allocation3] sm:$0xff] %v876
    %vm878 = vcmask 1043520
    %vm879 = vcmask 64516
    %vm880 = vmor %vm879, %vm878
    %881 = vst.msk [vmem:[#allocation3 + $0x8] sm:$0xff] %vm880, %v858
    %vm882 = vcmask 1040448
    %vm883 = vmand %vm882, %vm98
    %vm884 = vcmask 61444
    %vm885 = vsmask.f32 4352
    %vm886 = vmand %vm884, %vm885
    %vm887 = vmor %vm886, %vm883
    %v888 = vld [vmem:[#allocation3 + $0x10] sm:$0x11]
    %v889 = vsel %vm887, %v859, %v888
    %890 = vst [vmem:[#allocation3 + $0x10] sm:$0x11] %v889
    %v891 = vld [vmem:[#allocation3 + $0x18] sm:$0xff]
    %v892 = vsel %vm874, %v860, %v891
    %893 = vst [vmem:[#allocation3 + $0x18] sm:$0xff] %v892
    %894 = vst.msk [vmem:[#allocation3 + $0x20] sm:$0xff] %vm880, %v861
    %v895 = vld [vmem:[#allocation3 + $0x28] sm:$0x11]
    %v896 = vsel %vm887, %v862, %v895
    %897 = vst [vmem:[#allocation3 + $0x28] sm:$0x11] %v896
    %v898 = vld [vmem:[#allocation3] sm:$0xff]
    %v899 = vld [vmem:[#allocation3 + $0x8] sm:$0xff]
    %v900 = vld [vmem:[#allocation3 + $0x18] sm:$0xff]
    %v901 = vld [vmem:[#allocation3 + $0x20] sm:$0xff]
    %v902 = vld [vmem:[#allocation9] sm:$0xf]
    %v903 = vld [vmem:[#allocation9 + $0x4] sm:$0xf]
    %v904 = vld [vmem:[#allocation9 + $0x8] sm:$0xf]
    %v905 = vld [vmem:[#allocation9 + $0xc] sm:$0xf]
    %v906 = vld [vmem:[#allocation9 + $0x10] sm:$0xf]
    %v907 = vld [vmem:[#allocation9 + $0x14] sm:$0xf]
    %v908 = vld [vmem:[#allocation9 + $0x18] sm:$0xf]
    %v909 = vld [vmem:[#allocation9 + $0x1c] sm:$0xf]
    %v910 = vld [vmem:[#allocation9 + $0x20] sm:$0xf]
    %v911 = vld [vmem:[#allocation9 + $0x24] sm:$0xf]
    %v912 = vld [vmem:[#allocation9 + $0x28] sm:$0xf]
    %v913 = vld [vmem:[#allocation9 + $0x2c] sm:$0xf]
    %v914 = vld [vmem:[#allocation9 + $0x30] sm:$0xf]
    %v915 = vld [vmem:[#allocation9 + $0x34] sm:$0xf]
    %v916 = vld [vmem:[#allocation9 + $0x38] sm:$0xf]
    %v917 = vld [vmem:[#allocation9 + $0x3c] sm:$0xf]
    %v918 = vld [vmem:[#allocation9 + $0x40] sm:$0xf]
    %v919 = vld [vmem:[#allocation9 + $0x44] sm:$0xf]
    %v920 = vld [vmem:[#allocation3 + $0x10] sm:$0x11]
    %v921 = vld [vmem:[#allocation3 + $0x28] sm:$0x11]
    %v923 = vshrl.u32 %v898, 16
    %v925 = vrot.slane %v923, 4
    %v926 = vshll.u32 %v898, 16
    %v928 = vrot.slane %v926, 5
    %v929 = vor.u32 %v925, %v928
    %v930 = vrot.slane %v929, 4
    %v932 = vshll.u32 %v899, 16
    %v934 = vrot.slane %v932, 5
    %v935 = vsel %vm190, %v930, %v934
    %v936 = vshrl.u32 %v899, 16
    %v938 = vrot.slane %v936, 4
    %v939 = vor.u32 %v938, %v934
    %v940 = vrot.slane %v939, 4
    %v942 = vshll.u32 %v920, 16
    %v944 = vrot.slane %v942, 5
    %v945 = vsel %vm190, %v940, %v944
    %v947 = vshrl.u32 %v900, 16
    %v949 = vrot.slane %v947, 4
    %v950 = vshll.u32 %v900, 16
    %v952 = vrot.slane %v950, 5
    %v953 = vor.u32 %v949, %v952
    %v954 = vrot.slane %v953, 4
    %v956 = vshll.u32 %v901, 16
    %v958 = vrot.slane %v956, 5
    %v959 = vsel %vm190, %v954, %v958
    %v960 = vshrl.u32 %v901, 16
    %v962 = vrot.slane %v960, 4
    %v963 = vor.u32 %v962, %v958
    %v964 = vrot.slane %v963, 4
    %v966 = vshll.u32 %v921, 16
    %v968 = vrot.slane %v966, 5
    %v969 = vsel %vm190, %v964, %v968
    %s970 = scalar_lea.vmem [#allocation9], 72
    %v971 = vld [vmem:[%s970] sm:$0xf]
    %v972 = vld [vmem:[%s970 + $0x4] sm:$0xf]
    %v973 = vld [vmem:[%s970 + $0x8] sm:$0xf]
    %v974 = vld [vmem:[%s970 + $0xc] sm:$0xf]
    %v975 = vld [vmem:[%s970 + $0x10] sm:$0xf]
    %v976 = vld [vmem:[%s970 + $0x14] sm:$0xf]
    %v977 = vld [vmem:[%s970 + $0x18] sm:$0xf]
    %v978 = vld [vmem:[%s970 + $0x1c] sm:$0xf]
    %v979 = vld [vmem:[%s970 + $0x20] sm:$0xf]
    %v980 = vld [vmem:[%s970 + $0x24] sm:$0xf]
    %v981 = vld [vmem:[%s970 + $0x28] sm:$0xf]
    %v982 = vld [vmem:[%s970 + $0x2c] sm:$0xf]
    %v983 = vld [vmem:[%s970 + $0x30] sm:$0xf]
    %v984 = vld [vmem:[%s970 + $0x34] sm:$0xf]
    %v985 = vld [vmem:[%s970 + $0x38] sm:$0xf]
    %v986 = vld [vmem:[%s970 + $0x3c] sm:$0xf]
    %v987 = vld [vmem:[%s970 + $0x40] sm:$0xf]
    %v988 = vld [vmem:[%s970 + $0x44] sm:$0xf]
    %v989 = vunpack.c.l.b16 %v935
    %v990 = vunpack.c.h.b16 %v935
    %v991 = vunpack.c.l.b16 %v945
    %v992 = vunpack.c.h.b16 %v945
    %v993 = vunpack.c.l.b16 %v959
    %v994 = vunpack.c.h.b16 %v959
    %v995 = vunpack.c.l.b16 %v969
    %v996 = vunpack.c.h.b16 %v969
    %v997 = vpack.c.b16 %v991, %v989
    %v998 = vpack.c.b16 %v992, %v990
    %v999 = vpack.c.b16 %v995, %v993
    %v1000 = vpack.c.b16 %v996, %v994
    %v1021 = vunpack.c.l.b16 %v971
    %v1022 = vunpack.c.l.b16 %v972
    %v1023 = vunpack.c.l.b16 %v973
    %v1024 = vunpack.c.l.b16 %v974
    %v1025 = vunpack.c.l.b16 %v975
    %v1026 = vunpack.c.l.b16 %v976
    %v1027 = vunpack.c.l.b16 %v977
    %v1028 = vunpack.c.l.b16 %v978
    %v1029 = vunpack.c.l.b16 %v979
    %v1030 = vunpack.c.l.b16 %v980
    %v1031 = vunpack.c.l.b16 %v981
    %v1032 = vunpack.c.l.b16 %v982
    %v1033 = vunpack.c.l.b16 %v983
    %v1034 = vunpack.c.l.b16 %v984
    %v1035 = vunpack.c.l.b16 %v985
    %v1036 = vunpack.c.l.b16 %v986
    %v1037 = vunpack.c.l.b16 %v987
    %v1038 = vunpack.c.l.b16 %v988
    %v1039 = vpack.c.b16 %v1022, %v1021
    %v1040 = vpack.c.b16 %v1024, %v1023
    %v1041 = vpack.c.b16 %v1026, %v1025
    %v1042 = vpack.c.b16 %v1028, %v1027
    %v1043 = vpack.c.b16 %v1030, %v1029
    %v1044 = vpack.c.b16 %v1032, %v1031
    %v1045 = vpack.c.b16 %v1034, %v1033
    %v1046 = vpack.c.b16 %v1036, %v1035
    %v1047 = vpack.c.b16 %v1038, %v1037
    %vm1057 = vcmask 130048
    %v1059 = vsel %vm1057, %v998, 0
    %v1062 = vsel %vm1057, %v1000, 0
    %1064 = vmatprep.subr.bf16.mxu0 0
    %1065 = vmatpush1.bf16.msra.mxu0 %v1039
    %1066 = vmatprep.subr.bf16.mxu0 0
    %1067 = vmatpush1.bf16.msra.mxu0 %v1040
    %1068 = vmatprep.subr.bf16.mxu0 0
    %1069 = vmatpush1.bf16.msra.mxu0 %v1041
    %1070 = vmatprep.subr.bf16.mxu0 0
    %1071 = vmatpush1.bf16.msra.mxu0 %v1042
    %1072 = vmatprep.subr.bf16.mxu0 0
    %1073 = vmatpush1.bf16.msra.mxu0 %v1043
    %1074 = vmatprep.subr.bf16.mxu0 0
    %1075 = vmatpush1.bf16.msra.mxu0 %v1044
    %1076 = vmatprep.subr.bf16.mxu0 0
    %1077 = vmatpush1.bf16.msra.mxu0 %v1045
    %1078 = vmatprep.subr.bf16.mxu0 0
    %1079 = vmatpush1.bf16.msra.mxu0 %v1046
    %1080 = vmatprep.subr.bf16.mxu0 0
    %1081 = vmatpush1.bf16.msra.mxu0 %v1047
    %1082 = vmatprep.subr.bf16.mxu0 0
    %1083 = vmatpush1.bf16.msra.mxu0 0
    %1084 = vmatprep.subr.bf16.mxu0 0
    %1085 = vmatpush1.bf16.msra.mxu0 0
    %1086 = vmatprep.subr.bf16.mxu0 0
    %1087 = vmatpush1.bf16.msra.mxu0 0
    %1088 = vmatprep.subr.bf16.mxu0 0
    %1089 = vmatpush1.bf16.msra.mxu0 0
    %1090 = vmatprep.subr.bf16.mxu0 0
    %1091 = vmatpush1.bf16.msra.mxu0 0
    %1092 = vmatprep.subr.bf16.mxu0 0
    %1093 = vmatpush1.bf16.msra.mxu0 0
    %1094 = vmatprep.subr.bf16.mxu0 0
    %1095 = vmatpush1.bf16.msra.mxu0 0
    %1096 = vmatprep.mubr.bf16.mxu0 %v1059
    %1097 = vmatmul.mubr.bf16.gmra.mrb[0].mxu0 %v997
    %v1098 = vpop.f32.mrb[0].mxu0
    %v1099 = vadd.f32 0.0, %v1098
    %v1100 = vpop.f32.mrb[0].mxu0
    %v1101 = vpop.f32.mrb[0].mxu0
    %v1102 = vadd.f32 0.0, %v1101
    %v1103 = vpop.f32.mrb[0].mxu0
    %1104 = vmatprep.mubr.bf16.mxu0 %v1062
    %1105 = vmatmul.mubr.bf16.gmra.mrb[0].mxu0 %v999
    %v1106 = vpop.f32.mrb[0].mxu0
    %v1107 = vadd.f32 0.0, %v1106
    %v1108 = vpop.f32.mrb[0].mxu0
    %v1109 = vpop.f32.mrb[0].mxu0
    %v1110 = vadd.f32 0.0, %v1109
    %v1111 = vpop.f32.mrb[0].mxu0
    %1112 = vdwg.mxu0
    %v1117 = vunpack.c.l.b16 %v898
    %v1118 = vunpack.c.h.b16 %v898
    %v1119 = vunpack.c.l.b16 %v899
    %v1120 = vunpack.c.h.b16 %v899
    %v1121 = vunpack.c.l.b16 %v900
    %v1122 = vunpack.c.h.b16 %v900
    %v1123 = vunpack.c.l.b16 %v901
    %v1124 = vunpack.c.h.b16 %v901
    %v1125 = vpack.c.b16 %v1119, %v1117
    %v1126 = vpack.c.b16 %v1120, %v1118
    %v1127 = vpack.c.b16 %v1123, %v1121
    %v1128 = vpack.c.b16 %v1124, %v1122
    %v1149 = vunpack.c.l.b16 %v902
    %v1150 = vunpack.c.l.b16 %v903
    %v1151 = vunpack.c.l.b16 %v904
    %v1152 = vunpack.c.l.b16 %v905
    %v1153 = vunpack.c.l.b16 %v906
    %v1154 = vunpack.c.l.b16 %v907
    %v1155 = vunpack.c.l.b16 %v908
    %v1156 = vunpack.c.l.b16 %v909
    %v1157 = vunpack.c.l.b16 %v910
    %v1158 = vunpack.c.l.b16 %v911
    %v1159 = vunpack.c.l.b16 %v912
    %v1160 = vunpack.c.l.b16 %v913
    %v1161 = vunpack.c.l.b16 %v914
    %v1162 = vunpack.c.l.b16 %v915
    %v1163 = vunpack.c.l.b16 %v916
    %v1164 = vunpack.c.l.b16 %v917
    %v1165 = vunpack.c.l.b16 %v918
    %v1166 = vunpack.c.l.b16 %v919
    %v1167 = vpack.c.b16 %v1150, %v1149
    %v1168 = vpack.c.b16 %v1152, %v1151
    %v1169 = vpack.c.b16 %v1154, %v1153
    %v1170 = vpack.c.b16 %v1156, %v1155
    %v1171 = vpack.c.b16 %v1158, %v1157
    %v1172 = vpack.c.b16 %v1160, %v1159
    %v1173 = vpack.c.b16 %v1162, %v1161
    %v1174 = vpack.c.b16 %v1164, %v1163
    %v1175 = vpack.c.b16 %v1166, %v1165
    %v1186 = vsel %vm1057, %v1126, 0
    %v1189 = vsel %vm1057, %v1128, 0
    %1191 = vmatprep.subr.bf16.mxu0 0
    %1192 = vmatpush1.bf16.msra.mxu0 %v1167
    %1193 = vmatprep.subr.bf16.mxu0 0
    %1194 = vmatpush1.bf16.msra.mxu0 %v1168
    %1195 = vmatprep.subr.bf16.mxu0 0
    %1196 = vmatpush1.bf16.msra.mxu0 %v1169
    %1197 = vmatprep.subr.bf16.mxu0 0
    %1198 = vmatpush1.bf16.msra.mxu0 %v1170
    %1199 = vmatprep.subr.bf16.mxu0 0
    %1200 = vmatpush1.bf16.msra.mxu0 %v1171
    %1201 = vmatprep.subr.bf16.mxu0 0
    %1202 = vmatpush1.bf16.msra.mxu0 %v1172
    %1203 = vmatprep.subr.bf16.mxu0 0
    %1204 = vmatpush1.bf16.msra.mxu0 %v1173
    %1205 = vmatprep.subr.bf16.mxu0 0
    %1206 = vmatpush1.bf16.msra.mxu0 %v1174
    %1207 = vmatprep.subr.bf16.mxu0 0
    %1208 = vmatpush1.bf16.msra.mxu0 %v1175
    %1209 = vmatprep.subr.bf16.mxu0 0
    %1210 = vmatpush1.bf16.msra.mxu0 0
    %1211 = vmatprep.subr.bf16.mxu0 0
    %1212 = vmatpush1.bf16.msra.mxu0 0
    %1213 = vmatprep.subr.bf16.mxu0 0
    %1214 = vmatpush1.bf16.msra.mxu0 0
    %1215 = vmatprep.subr.bf16.mxu0 0
    %1216 = vmatpush1.bf16.msra.mxu0 0
    %1217 = vmatprep.subr.bf16.mxu0 0
    %1218 = vmatpush1.bf16.msra.mxu0 0
    %1219 = vmatprep.subr.bf16.mxu0 0
    %1220 = vmatpush1.bf16.msra.mxu0 0
    %1221 = vmatprep.subr.bf16.mxu0 0
    %1222 = vmatpush1.bf16.msra.mxu0 0
    %1223 = vmatprep.mubr.bf16.mxu0 %v1186
    %1224 = vmatmul.mubr.bf16.gmra.mrb[0].mxu0 %v1125
    %v1225 = vpop.f32.mrb[0].mxu0
    %v1226 = vadd.f32 %v1099, %v1225
    %v1227 = vpop.f32.mrb[0].mxu0
    %v1228 = vpop.f32.mrb[0].mxu0
    %v1229 = vadd.f32 %v1102, %v1228
    %v1230 = vpop.f32.mrb[0].mxu0
    %1231 = vmatprep.mubr.bf16.mxu0 %v1189
    %1232 = vmatmul.mubr.bf16.gmra.mrb[0].mxu0 %v1127
    %v1233 = vpop.f32.mrb[0].mxu0
    %v1234 = vadd.f32 %v1107, %v1233
    %v1235 = vpop.f32.mrb[0].mxu0
    %v1236 = vpop.f32.mrb[0].mxu0
    %v1237 = vadd.f32 %v1110, %v1236
    %v1238 = vpop.f32.mrb[0].mxu0
    %1239 = vdwg.mxu0
    %v1240 = vld [vmem:[#allocation3] sm:$0xee]
    %v1241 = vld [vmem:[#allocation3 + $0x18] sm:$0xee]
    %v1246 = vrot.slane %v1240, 5
    %v1247 = vrot.slane %v1246, 4
    %v1248 = vrot.slane %v899, 5
    %v1249 = vsel %vm445, %v1247, %v1248
    %v1250 = vrot.slane %v1248, 4
    %v1251 = vrot.slane %v920, 5
    %v1252 = vsel %vm445, %v1250, %v1251
    %v1253 = vrot.slane %v1241, 5
    %v1254 = vrot.slane %v1253, 4
    %v1255 = vrot.slane %v901, 5
    %v1256 = vsel %vm445, %v1254, %v1255
    %v1257 = vrot.slane %v1255, 4
    %v1258 = vrot.slane %v921, 5
    %v1259 = vsel %vm445, %v1257, %v1258
    %s1260 = scalar_lea.vmem [#allocation9], 144
    %v1261 = vld [vmem:[%s1260] sm:$0xf]
    %v1262 = vld [vmem:[%s1260 + $0x4] sm:$0xf]
    %v1263 = vld [vmem:[%s1260 + $0x8] sm:$0xf]
    %v1264 = vld [vmem:[%s1260 + $0xc] sm:$0xf]
    %v1265 = vld [vmem:[%s1260 + $0x10] sm:$0xf]
    %v1266 = vld [vmem:[%s1260 + $0x14] sm:$0xf]
    %v1267 = vld [vmem:[%s1260 + $0x18] sm:$0xf]
    %v1268 = vld [vmem:[%s1260 + $0x1c] sm:$0xf]
    %v1269 = vld [vmem:[%s1260 + $0x20] sm:$0xf]
    %v1270 = vld [vmem:[%s1260 + $0x24] sm:$0xf]
    %v1271 = vld [vmem:[%s1260 + $0x28] sm:$0xf]
    %v1272 = vld [vmem:[%s1260 + $0x2c] sm:$0xf]
    %v1273 = vld [vmem:[%s1260 + $0x30] sm:$0xf]
    %v1274 = vld [vmem:[%s1260 + $0x34] sm:$0xf]
    %v1275 = vld [vmem:[%s1260 + $0x38] sm:$0xf]
    %v1276 = vld [vmem:[%s1260 + $0x3c] sm:$0xf]
    %v1277 = vld [vmem:[%s1260 + $0x40] sm:$0xf]
    %v1278 = vld [vmem:[%s1260 + $0x44] sm:$0xf]
    %v1279 = vunpack.c.l.b16 %v1249
    %v1280 = vunpack.c.h.b16 %v1249
    %v1281 = vunpack.c.l.b16 %v1252
    %v1282 = vunpack.c.h.b16 %v1252
    %v1283 = vunpack.c.l.b16 %v1256
    %v1284 = vunpack.c.h.b16 %v1256
    %v1285 = vunpack.c.l.b16 %v1259
    %v1286 = vunpack.c.h.b16 %v1259
    %v1287 = vpack.c.b16 %v1281, %v1279
    %v1288 = vpack.c.b16 %v1282, %v1280
    %v1289 = vpack.c.b16 %v1285, %v1283
    %v1290 = vpack.c.b16 %v1286, %v1284
    %v1311 = vunpack.c.l.b16 %v1261
    %v1312 = vunpack.c.l.b16 %v1262
    %v1313 = vunpack.c.l.b16 %v1263
    %v1314 = vunpack.c.l.b16 %v1264
    %v1315 = vunpack.c.l.b16 %v1265
    %v1316 = vunpack.c.l.b16 %v1266
    %v1317 = vunpack.c.l.b16 %v1267
    %v1318 = vunpack.c.l.b16 %v1268
    %v1319 = vunpack.c.l.b16 %v1269
    %v1320 = vunpack.c.l.b16 %v1270
    %v1321 = vunpack.c.l.b16 %v1271
    %v1322 = vunpack.c.l.b16 %v1272
    %v1323 = vunpack.c.l.b16 %v1273
    %v1324 = vunpack.c.l.b16 %v1274
    %v1325 = vunpack.c.l.b16 %v1275
    %v1326 = vunpack.c.l.b16 %v1276
    %v1327 = vunpack.c.l.b16 %v1277
    %v1328 = vunpack.c.l.b16 %v1278
    %v1329 = vpack.c.b16 %v1312, %v1311
    %v1330 = vpack.c.b16 %v1314, %v1313
    %v1331 = vpack.c.b16 %v1316, %v1315
    %v1332 = vpack.c.b16 %v1318, %v1317
    %v1333 = vpack.c.b16 %v1320, %v1319
    %v1334 = vpack.c.b16 %v1322, %v1321
    %v1335 = vpack.c.b16 %v1324, %v1323
    %v1336 = vpack.c.b16 %v1326, %v1325
    %v1337 = vpack.c.b16 %v1328, %v1327
    %v1348 = vsel %vm1057, %v1288, 0
    %v1351 = vsel %vm1057, %v1290, 0
    %1353 = vmatprep.subr.bf16.mxu0 0
    %1354 = vmatpush1.bf16.msra.mxu0 %v1329
    %1355 = vmatprep.subr.bf16.mxu0 0
    %1356 = vmatpush1.bf16.msra.mxu0 %v1330
    %1357 = vmatprep.subr.bf16.mxu0 0
    %1358 = vmatpush1.bf16.msra.mxu0 %v1331
    %1359 = vmatprep.subr.bf16.mxu0 0
    %1360 = vmatpush1.bf16.msra.mxu0 %v1332
    %1361 = vmatprep.subr.bf16.mxu0 0
    %1362 = vmatpush1.bf16.msra.mxu0 %v1333
    %1363 = vmatprep.subr.bf16.mxu0 0
    %1364 = vmatpush1.bf16.msra.mxu0 %v1334
    %1365 = vmatprep.subr.bf16.mxu0 0
    %1366 = vmatpush1.bf16.msra.mxu0 %v1335
    %1367 = vmatprep.subr.bf16.mxu0 0
    %1368 = vmatpush1.bf16.msra.mxu0 %v1336
    %1369 = vmatprep.subr.bf16.mxu0 0
    %1370 = vmatpush1.bf16.msra.mxu0 %v1337
    %1371 = vmatprep.subr.bf16.mxu0 0
    %1372 = vmatpush1.bf16.msra.mxu0 0
    %1373 = vmatprep.subr.bf16.mxu0 0
    %1374 = vmatpush1.bf16.msra.mxu0 0
    %1375 = vmatprep.subr.bf16.mxu0 0
    %1376 = vmatpush1.bf16.msra.mxu0 0
    %1377 = vmatprep.subr.bf16.mxu0 0
    %1378 = vmatpush1.bf16.msra.mxu0 0
    %1379 = vmatprep.subr.bf16.mxu0 0
    %1380 = vmatpush1.bf16.msra.mxu0 0
    %1381 = vmatprep.subr.bf16.mxu0 0
    %1382 = vmatpush1.bf16.msra.mxu0 0
    %1383 = vmatprep.subr.bf16.mxu0 0
    %1384 = vmatpush1.bf16.msra.mxu0 0
    %1385 = vmatprep.mubr.bf16.mxu0 %v1348
    %1386 = vmatmul.mubr.bf16.gmra.mrb[0].mxu0 %v1287
    %v1387 = vpop.f32.mrb[0].mxu0
    %v1388 = vadd.f32 0.0, %v1387
    %v1389 = vpop.f32.mrb[0].mxu0
    %v1390 = vpop.f32.mrb[0].mxu0
    %v1391 = vadd.f32 0.0, %v1390
    %v1392 = vpop.f32.mrb[0].mxu0
    %1393 = vmatprep.mubr.bf16.mxu0 %v1351
    %1394 = vmatmul.mubr.bf16.gmra.mrb[0].mxu0 %v1289
    %v1395 = vpop.f32.mrb[0].mxu0
    %v1396 = vadd.f32 0.0, %v1395
    %v1397 = vpop.f32.mrb[0].mxu0
    %v1398 = vpop.f32.mrb[0].mxu0
    %v1399 = vadd.f32 0.0, %v1398
    %v1400 = vpop.f32.mrb[0].mxu0
    %1401 = vdwg.mxu0
    %v1402 = vadd.f32 %v1226, %v1388
    %v1403 = vadd.f32 %v1229, %v1391
    %v1404 = vadd.f32 %v1234, %v1396
    %v1405 = vadd.f32 %v1237, %v1399
    %v1406 = vld [vmem:[%s5] sm:$0x1]
    %v1407 = vld [vmem:[%s6] sm:$0x1]
    %v1408 = vadd.f32 %v1402, %v1403
    %v1409 = vadd.f32 %v1408, %v1404
    %v1410 = vadd.f32 %v1409, %v1405
    %v1411 = vrot.slane %v1410, 4
    %v1412 = vadd.f32 %v1410, %v1411
    %v1413 = vrot.slane %v1412, 2
    %v1414 = vadd.f32 %v1412, %v1413
    %v1415 = vrot.slane %v1414, 1
    %v1416 = vadd.f32 %v1414, %v1415
    %v1417 = vld [vmem:[#allocation10] sm:$0xff]
    %v1418 = vld [vmem:[#allocation10 + $0x8] sm:$0xff]
    %v1419 = vld [vmem:[#allocation10 + $0x10] sm:$0xff]
    %v1420 = vld [vmem:[#allocation10 + $0x18] sm:$0xff]
    %v1421 = vld [vmem:[#allocation10 + $0x20] sm:$0xff]
    %v1422 = vld [vmem:[#allocation10 + $0x28] sm:$0xff]
    %v1423 = vld [vmem:[#allocation10 + $0x30] sm:$0xff]
    %v1424 = vld [vmem:[#allocation10 + $0x38] sm:$0xff]
    %v1425 = vld [vmem:[#allocation10 + $0x40] sm:$0xff]
    %v1426 = vld [vmem:[#allocation10 + $0x48] sm:$0xff]
    %v1427 = vld [vmem:[#allocation10 + $0x50] sm:$0xff]
    %v1428 = vld [vmem:[#allocation10 + $0x58] sm:$0xff]
    %v1429 = vld [vmem:[#allocation10 + $0x60] sm:$0xff]
    %v1430 = vld [vmem:[#allocation10 + $0x68] sm:$0xff]
    %v1431 = vld [vmem:[#allocation10 + $0x70] sm:$0xff]
    %v1432 = vld [vmem:[#allocation10 + $0x78] sm:$0xff]
    %1433 = vmatprep.subr.mxu0 0.0
    %1434 = vmatpush1.msra.mxu0 %v1417
    %1435 = vmatprep.subr.mxu0 0.0
    %1436 = vmatpush1.msra.mxu0 %v1418
    %1437 = vmatprep.subr.mxu0 0.0
    %1438 = vmatpush1.msra.mxu0 %v1419
    %1439 = vmatprep.subr.mxu0 0.0
    %1440 = vmatpush1.msra.mxu0 %v1420
    %1441 = vmatprep.subr.mxu0 0.0
    %1442 = vmatpush1.msra.mxu0 %v1421
    %1443 = vmatprep.subr.mxu0 0.0
    %1444 = vmatpush1.msra.mxu0 %v1422
    %1445 = vmatprep.subr.mxu0 0.0
    %1446 = vmatpush1.msra.mxu0 %v1423
    %1447 = vmatprep.subr.mxu0 0.0
    %1448 = vmatpush1.msra.mxu0 %v1424
    %1449 = vmatprep.subr.mxu0 0.0
    %1450 = vmatpush1.msra.mxu0 %v1425
    %1451 = vmatprep.subr.mxu0 0.0
    %1452 = vmatpush1.msra.mxu0 %v1426
    %1453 = vmatprep.subr.mxu0 0.0
    %1454 = vmatpush1.msra.mxu0 %v1427
    %1455 = vmatprep.subr.mxu0 0.0
    %1456 = vmatpush1.msra.mxu0 %v1428
    %1457 = vmatprep.subr.mxu0 0.0
    %1458 = vmatpush1.msra.mxu0 %v1429
    %1459 = vmatprep.subr.mxu0 0.0
    %1460 = vmatpush1.msra.mxu0 %v1430
    %1461 = vmatprep.subr.mxu0 0.0
    %1462 = vmatpush1.msra.mxu0 %v1431
    %1463 = vmatprep.subr.mxu0 0.0
    %1464 = vmatpush1.msra.mxu0 %v1432
    %1465 = vmatprep.subr.mxu0 0.0
    %1466 = vmatpush1.msra.mxu0 0.0
    %1467 = vmatprep.subr.mxu0 0.0
    %1468 = vmatpush1.msra.mxu0 0.0
    %1469 = vmatprep.subr.mxu0 0.0
    %1470 = vmatpush1.msra.mxu0 0.0
    %1471 = vmatprep.subr.mxu0 0.0
    %1472 = vmatpush1.msra.mxu0 0.0
    %1473 = vmatprep.subr.mxu0 0.0
    %1474 = vmatpush1.msra.mxu0 0.0
    %1475 = vmatprep.subr.mxu0 0.0
    %1476 = vmatpush1.msra.mxu0 0.0
    %1477 = vmatprep.subr.mxu0 0.0
    %1478 = vmatpush1.msra.mxu0 0.0
    %1479 = vmatprep.subr.mxu0 0.0
    %1480 = vmatpush1.msra.mxu0 0.0
    %1481 = vmatprep.subr.mxu0 0.0
    %1482 = vmatpush1.msra.mxu0 0.0
    %1483 = vmatprep.subr.mxu0 0.0
    %1484 = vmatpush1.msra.mxu0 0.0
    %1485 = vmatprep.subr.mxu0 0.0
    %1486 = vmatpush1.msra.mxu0 0.0
    %1487 = vmatprep.subr.mxu0 0.0
    %1488 = vmatpush1.msra.mxu0 0.0
    %1489 = vmatprep.subr.mxu0 0.0
    %1490 = vmatpush1.msra.mxu0 0.0
    %1491 = vmatprep.subr.mxu0 0.0
    %1492 = vmatpush1.msra.mxu0 0.0
    %1493 = vmatprep.subr.mxu0 0.0
    %1494 = vmatpush1.msra.mxu0 0.0
    %1495 = vmatprep.subr.mxu0 0.0
    %1496 = vmatpush1.msra.mxu0 0.0
    %1497 = vmatprep.mubr.f32.mxu0 0.0
    %1498 = vmatmul.mubr.f32.gmra.mrb[0].mxu0 %v1416
    %v1499 = vpop.f32.mrb[0].mxu0
    %v1500 = vadd.f32 0.0, %v1499
    %v1501 = vpop.f32.mrb[0].mxu0
    %1502 = vdwg.mxu0
    %v1503 = vlaneseq
    %v1504 = vshrl.u32 %v1503, 7
    %v1505 = vsub.s32 0, %v1504
    %v1506 = vrot.slane %v1500, %v1505
    %v1507 = vsub.f32 %v1402, %v1506
    %v1508 = vsub.f32 %v1403, %v1506
    %v1509 = vsub.f32 %v1404, %v1506
    %v1510 = vsub.f32 %v1405, %v1506
    %v1511 = vmul.f32 %v1507, %v1507
    %v1512 = vmul.f32 %v1508, %v1508
    %v1513 = vmul.f32 %v1509, %v1509
    %v1514 = vmul.f32 %v1510, %v1510
    %v1515 = vadd.f32 %v1511, %v1512
    %v1516 = vadd.f32 %v1515, %v1513
    %v1517 = vadd.f32 %v1516, %v1514
    %v1518 = vrot.slane %v1517, 4
    %v1519 = vadd.f32 %v1517, %v1518
    %v1520 = vrot.slane %v1519, 2
    %v1521 = vadd.f32 %v1519, %v1520
    %v1522 = vrot.slane %v1521, 1
    %v1523 = vadd.f32 %v1521, %v1522
    %1524 = vmatprep.subr.mxu0 0.0
    %1525 = vmatpush1.msra.mxu0 %v1417
    %1526 = vmatprep.subr.mxu0 0.0
    %1527 = vmatpush1.msra.mxu0 %v1418
    %1528 = vmatprep.subr.mxu0 0.0
    %1529 = vmatpush1.msra.mxu0 %v1419
    %1530 = vmatprep.subr.mxu0 0.0
    %1531 = vmatpush1.msra.mxu0 %v1420
    %1532 = vmatprep.subr.mxu0 0.0
    %1533 = vmatpush1.msra.mxu0 %v1421
    %1534 = vmatprep.subr.mxu0 0.0
    %1535 = vmatpush1.msra.mxu0 %v1422
    %1536 = vmatprep.subr.mxu0 0.0
    %1537 = vmatpush1.msra.mxu0 %v1423
    %1538 = vmatprep.subr.mxu0 0.0
    %1539 = vmatpush1.msra.mxu0 %v1424
    %1540 = vmatprep.subr.mxu0 0.0
    %1541 = vmatpush1.msra.mxu0 %v1425
    %1542 = vmatprep.subr.mxu0 0.0
    %1543 = vmatpush1.msra.mxu0 %v1426
    %1544 = vmatprep.subr.mxu0 0.0
    %1545 = vmatpush1.msra.mxu0 %v1427
    %1546 = vmatprep.subr.mxu0 0.0
    %1547 = vmatpush1.msra.mxu0 %v1428
    %1548 = vmatprep.subr.mxu0 0.0
    %1549 = vmatpush1.msra.mxu0 %v1429
    %1550 = vmatprep.subr.mxu0 0.0
    %1551 = vmatpush1.msra.mxu0 %v1430
    %1552 = vmatprep.subr.mxu0 0.0
    %1553 = vmatpush1.msra.mxu0 %v1431
    %1554 = vmatprep.subr.mxu0 0.0
    %1555 = vmatpush1.msra.mxu0 %v1432
    %1556 = vmatprep.subr.mxu0 0.0
    %1557 = vmatpush1.msra.mxu0 0.0
    %1558 = vmatprep.subr.mxu0 0.0
    %1559 = vmatpush1.msra.mxu0 0.0
    %1560 = vmatprep.subr.mxu0 0.0
    %1561 = vmatpush1.msra.mxu0 0.0
    %1562 = vmatprep.subr.mxu0 0.0
    %1563 = vmatpush1.msra.mxu0 0.0
    %1564 = vmatprep.subr.mxu0 0.0
    %1565 = vmatpush1.msra.mxu0 0.0
    %1566 = vmatprep.subr.mxu0 0.0
    %1567 = vmatpush1.msra.mxu0 0.0
    %1568 = vmatprep.subr.mxu0 0.0
    %1569 = vmatpush1.msra.mxu0 0.0
    %1570 = vmatprep.subr.mxu0 0.0
    %1571 = vmatpush1.msra.mxu0 0.0
    %1572 = vmatprep.subr.mxu0 0.0
    %1573 = vmatpush1.msra.mxu0 0.0
    %1574 = vmatprep.subr.mxu0 0.0
    %1575 = vmatpush1.msra.mxu0 0.0
    %1576 = vmatprep.subr.mxu0 0.0
    %1577 = vmatpush1.msra.mxu0 0.0
    %1578 = vmatprep.subr.mxu0 0.0
    %1579 = vmatpush1.msra.mxu0 0.0
    %1580 = vmatprep.subr.mxu0 0.0
    %1581 = vmatpush1.msra.mxu0 0.0
    %1582 = vmatprep.subr.mxu0 0.0
    %1583 = vmatpush1.msra.mxu0 0.0
    %1584 = vmatprep.subr.mxu0 0.0
    %1585 = vmatpush1.msra.mxu0 0.0
    %1586 = vmatprep.subr.mxu0 0.0
    %1587 = vmatpush1.msra.mxu0 0.0
    %1588 = vmatprep.mubr.f32.mxu0 0.0
    %1589 = vmatmul.mubr.f32.gmra.mrb[0].mxu0 %v1523
    %v1590 = vpop.f32.mrb[0].mxu0
    %v1591 = vadd.f32 1e-05, %v1590
    %v1592 = vpop.f32.mrb[0].mxu0
    %1593 = vdwg.mxu0
    %v1594 = vrsqrt.pop %v1591
    %v1595 = vmul.f32 %v1406, %v1594
    %v1596 = vmul.f32 %v1500, %v1595
    %v1597 = vsub.f32 %v1407, %v1596
    %v1599 = vlaneseq
    %v1600 = vshrl.u32 %v1599, 7
    %v1601 = vsub.s32 0, %v1600
    %v1602 = vrot.slane %v1595, %v1601
    %v1604 = vmul.f32 %v1402, %v1602
    %v1605 = vmul.f32 %v1403, %v1602
    %v1606 = vmul.f32 %v1404, %v1602
    %v1607 = vmul.f32 %v1405, %v1602
    %v1609 = vlaneseq
    %v1610 = vshrl.u32 %v1609, 7
    %v1611 = vsub.s32 0, %v1610
    %v1612 = vrot.slane %v1597, %v1611
    %v1614 = vadd.f32 %v1604, %v1612
    %v1615 = vadd.f32 %v1605, %v1612
    %v1616 = vadd.f32 %v1606, %v1612
    %v1617 = vadd.f32 %v1607, %v1612
    %v1618 = vmax.f32 %v1614, 0.0
    %v1619 = vmax.f32 %v1615, 0.0
    %v1620 = vmax.f32 %v1616, 0.0
    %v1621 = vmax.f32 %v1617, 0.0
    %1622 = vst [vmem:[#allocation12] sm:$0xff] %v1618
    %1623 = vst [vmem:[#allocation12 + $0x8] sm:$0xff] %v1619
    %1624 = vst [vmem:[#allocation12 + $0x10] sm:$0xff] %v1620
    %1625 = vst [vmem:[#allocation12 + $0x18] sm:$0xff] %v1621
    // Predicated region
    $region50: #{tpu_custom_call.1} parent=1 // pred_check
      _
    $region51: #{tpu_custom_call.1} parent=1 // pred_check_branch
      %1627 = sbr.rel (0) target = $region53
    $region52: #{tpu_custom_call.1} parent=1 // pred_region
      %s1629 = ssub.s32 512, 512
      %1630 = vsyncadd [#allocation6], %s1629
      %s1631 = sshll.u32 [#allocation12], 4
      %s1632 = int_to_ptr.vmem [resolvable:$true] %s1631
      %1637 = dma.vmem_to_hbm [thread:$0]  %s1632, 512, %s8, [#allocation6], 128, 128, 8
    $region53: #{tpu_custom_call.1} parent=1 // pred_fallthru
      _
    // Predicated region
    $region54: #{tpu_custom_call.1} parent=1 // pred_check
      _
    $region55: #{tpu_custom_call.1} parent=1 // pred_check_branch
      %1639 = sbr.rel (0) target = $region57
    $region56: #{tpu_custom_call.1} parent=1 // pred_region
      %1640 = dma.done [#allocation6], 512
    $region57: #{tpu_custom_call.1} parent=1 // pred_fallthru
      _
    %1641 = vsyncpa [#allocation5], 1
    %1642 = vsyncpa [#allocation8], 1
    %1643 = vsyncpa [#allocation11], 1
    %1644 = vsyncpa [#allocation6], 1

</llo_original>
